<compile_context>
chip_gen: v7x
topology: tpu7x:2x2x1
jax: 0.10.0
libtpu: 0.0.40
codegen_flags: <defaults>
</compile_context>

<pallas_src>
import jax
import jax.numpy as jnp
from jax.experimental import pallas as pl
from jax.experimental.pallas import tpu as pltpu

BN_EPS = 1e-5


# ----------------------------------------------------------------------------
# small helpers
# ----------------------------------------------------------------------------
def _ceil_to(x, m):
    return ((x + m - 1) // m) * m


def _cdiv(a, b):
    return -(-a // b)


def _pick_tile(padded_dim, candidates):
    for c in candidates:
        if padded_dim % c == 0:
            return c
    return 128


def _choose_rows_tile(m):
    """Row (M) tile: large tiles for big M, full-dim block for small M (no HBM pad)."""
    if m >= 512:
        return 512
    if m <= 8 or m % 8 == 0:
        return m
    return (m // 8) * 8  # ragged tail handled by masked epilogue / masked writeback


def _default_vmem_limit():
    try:
        cap = int(pltpu.get_tpu_info().vmem_capacity_bytes)
        return max(32 * 1024 * 1024, min(cap * 3 // 4, 96 * 1024 * 1024))
    except Exception:
        return 48 * 1024 * 1024  # safe on v5e/v6e (128 MiB) and v7x (64 MiB)


VMEM_LIMIT = _default_vmem_limit()


def _cparams(*semantics):
    return pltpu.CompilerParams(dimension_semantics=semantics,
                                vmem_limit_bytes=VMEM_LIMIT)


# ----------------------------------------------------------------------------
# Pallas kernels
# ----------------------------------------------------------------------------
def _make_mm_bn_kernel(m_rows, tm, fused_in_affine):
    """bf16 GEMM, f32 accumulation, fused per-channel sum / sum-of-squares epilogue.

    Optionally applies a per-input-channel scale/shift + ReLU to the A tile before the
    dot (fusing the previous conv's BatchNorm+ReLU into this GEMM's load).
    Ragged last M blocks are masked out of the statistics (no HBM pad of activations).
    """
    ragged = (m_rows % tm) != 0

    def epilogue(acc, o_ref, sum_ref, sq_ref):
        o_ref[...] = acc.astype(o_ref.dtype)
        if ragged:
            rows = (pl.program_id(0) * tm
                    + jax.lax.broadcasted_iota(jnp.int32, (tm, 1), 0))
            acc = jnp.where(rows < m_rows, acc, 0.0)
        sum_ref[0] = jnp.sum(acc, axis=0, keepdims=True)
        sq_ref[0] = jnp.sum(acc * acc, axis=0, keepdims=True)

    if fused_in_affine:
        def kernel(a_ref, s_ref, b_ref, w_ref, o_ref, sum_ref, sq_ref, acc_ref):
            @pl.when(pl.program_id(2) == 0)
            def _():
                acc_ref[...] = jnp.zeros_like(acc_ref)

            a = jnp.maximum(
                a_ref[...].astype(jnp.float32) * s_ref[...] + b_ref[...],
                0.0).astype(jnp.bfloat16)
            acc_ref[...] += jnp.dot(a, w_ref[...],
                                    preferred_element_type=jnp.float32)

            @pl.when(pl.program_id(2) == pl.num_programs(2) - 1)
            def _():
                epilogue(acc_ref[...], o_ref, sum_ref, sq_ref)
    else:
        def kernel(a_ref, w_ref, o_ref, sum_ref, sq_ref, acc_ref):
            @pl.when(pl.program_id(2) == 0)
            def _():
                acc_ref[...] = jnp.zeros_like(acc_ref)

            acc_ref[...] += jnp.dot(a_ref[...], w_ref[...],
                                    preferred_element_type=jnp.float32)

            @pl.when(pl.program_id(2) == pl.num_programs(2) - 1)
            def _():
                epilogue(acc_ref[...], o_ref, sum_ref, sq_ref)

    return kernel


def _mm_bias_kernel(a_ref, w_ref, bias_ref, o_ref, acc_ref):
    """bf16 GEMM with f32 accumulation and fused bias-add epilogue."""
    @pl.when(pl.program_id(2) == 0)
    def _():
        acc_ref[...] = jnp.zeros_like(acc_ref)

    acc_ref[...] += jnp.dot(a_ref[...], w_ref[...],
                            preferred_element_type=jnp.float32)

    @pl.when(pl.program_id(2) == pl.num_programs(2) - 1)
    def _():
        o_ref[...] = (acc_ref[...] + bias_ref[...]).astype(o_ref.dtype)


def _affine_relu_kernel(y_ref, s_ref, b_ref, o_ref):
    v = y_ref[...].astype(jnp.float32) * s_ref[...] + b_ref[...]
    o_ref[...] = jnp.maximum(v, 0.0).astype(o_ref.dtype)


def _affine_kernel(y_ref, s_ref, b_ref, o_ref):
    v = y_ref[...].astype(jnp.float32) * s_ref[...] + b_ref[...]
    o_ref[...] = v.astype(o_ref.dtype)


def _affine_add_relu_kernel(y_ref, s_ref, b_ref, r_ref, o_ref):
    v = (y_ref[...].astype(jnp.float32) * s_ref[...] + b_ref[...]
         + r_ref[...].astype(jnp.float32))
    o_ref[...] = jnp.maximum(v, 0.0).astype(o_ref.dtype)


# ----------------------------------------------------------------------------
# GEMM wrappers
# ----------------------------------------------------------------------------
def matmul_bn(rows, wmat, in_affine=None):
    """rows (M, Kp) bf16 x wmat (Kp, Np) -> y (M, Np) bf16 + per-tile col sums/sumsqs.

    If `in_affine=(scale, shift)` (each (1, Kp) f32) is given, relu(rows*scale+shift)
    is applied to each A tile before the dot (fused previous-BN prologue).
    """
    M, K = rows.shape
    Kp, Np = wmat.shape
    assert K == Kp, (K, Kp)
    tm = _choose_rows_tile(M)
    tn = _pick_tile(Np, (512, 256, 128))
    tk = _pick_tile(Kp, (512, 256, 128))
    nmt = _cdiv(M, tm)

    kernel = _make_mm_bn_kernel(M, tm, in_affine is not None)
    row_spec = pl.BlockSpec((tm, tk), lambda i, j, k: (i, k))
    in_specs = [row_spec]
    operands = [rows]
    if in_affine is not None:
        vec_spec = pl.BlockSpec((1, tk), lambda i, j, k: (0, k))
        in_specs += [vec_spec, vec_spec]
        operands += [in_affine[0], in_affine[1]]
    in_specs.append(pl.BlockSpec((tk, tn), lambda i, j, k: (k, j)))
    operands.append(wmat)

    y, sums, sqs = pl.pallas_call(
        kernel,
        out_shape=(jax.ShapeDtypeStruct((M, Np), jnp.bfloat16),
                   jax.ShapeDtypeStruct((nmt, 1, Np), jnp.float32),
                   jax.ShapeDtypeStruct((nmt, 1, Np), jnp.float32)),
        grid_spec=pltpu.PrefetchScalarGridSpec(
            num_scalar_prefetch=0,
            grid=(nmt, Np // tn, Kp // tk),
            in_specs=in_specs,
            out_specs=[pl.BlockSpec((tm, tn), lambda i, j, k: (i, j)),
                       pl.BlockSpec((1, 1, tn), lambda i, j, k: (i, 0, j)),
                       pl.BlockSpec((1, 1, tn), lambda i, j, k: (i, 0, j))],
            scratch_shapes=[pltpu.VMEM((tm, tn), jnp.float32)]),
        compiler_params=_cparams("parallel", "parallel", "arbitrary"),
    )(*operands)
    return y, sums, sqs


def matmul_bias(rows, wmat, bias_p, out_dtype):
    """rows (M, Kp) x wmat (Kp, Np) + bias (1, Np) -> (M, Np) in out_dtype."""
    M, K = rows.shape
    Kp, Np = wmat.shape
    assert K == Kp, (K, Kp)
    tm = _choose_rows_tile(M)
    tn = _pick_tile(Np, (512, 256, 128))
    tk = _pick_tile(Kp, (512, 256, 128))
    return pl.pallas_call(
        _mm_bias_kernel,
        out_shape=jax.ShapeDtypeStruct((M, Np), out_dtype),
        grid_spec=pltpu.PrefetchScalarGridSpec(
            num_scalar_prefetch=0,
            grid=(_cdiv(M, tm), Np // tn, Kp // tk),
            in_specs=[pl.BlockSpec((tm, tk), lambda i, j, k: (i, k)),
                      pl.BlockSpec((tk, tn), lambda i, j, k: (k, j)),
                      pl.BlockSpec((1, tn), lambda i, j, k: (0, j))],
            out_specs=pl.BlockSpec((tm, tn), lambda i, j, k: (i, j)),
            scratch_shapes=[pltpu.VMEM((tm, tn), jnp.float32)]),
        compiler_params=_cparams("parallel", "parallel", "arbitrary"),
    )(rows, wmat, bias_p)


# ----------------------------------------------------------------------------
# elementwise / pooling Pallas kernels
# ----------------------------------------------------------------------------
def pallas_affine(y, scale, shift, residual=None, relu=True):
    """Tiled per-channel scale/shift (+ optional residual, + optional ReLU) on rows."""
    M, Np = y.shape
    bm = _choose_rows_tile(M)
    row_spec = pl.BlockSpec((bm, Np), lambda i: (i, 0))
    vec_spec = pl.BlockSpec((1, Np), lambda i: (0, 0))
    if residual is not None:
        kern = _affine_add_relu_kernel
        operands = (y, scale, shift, residual)
        in_specs = [row_spec, vec_spec, vec_spec, row_spec]
    else:
        kern = _affine_relu_kernel if relu else _affine_kernel
        operands = (y, scale, shift)
        in_specs = [row_spec, vec_spec, vec_spec]
    return pl.pallas_call(
        kern,
        out_shape=jax.ShapeDtypeStruct((M, Np), jnp.bfloat16),
        grid_spec=pltpu.PrefetchScalarGridSpec(
            num_scalar_prefetch=0,
            grid=(_cdiv(M, bm),),
            in_specs=in_specs,
            out_specs=row_spec),
        compiler_params=_cparams("parallel"),
    )(*operands)


def pallas_global_avgpool(x):
    """NHWC -> (N, 1, 1, C) global average pool, chunked over rows (VMEM-friendly)."""
    N, H, W, C = x.shape
    hb = max(1, min(H, (1 << 20) // max(1, W * C * x.dtype.itemsize)))
    nh = _cdiv(H, hb)
    ragged = (H % hb) != 0
    inv = 1.0 / float(H * W)

    def kern(x_ref, o_ref, acc_ref):
        @pl.when(pl.program_id(1) == 0)
        def _():
            acc_ref[...] = jnp.zeros_like(acc_ref)

        v = x_ref[0].astype(jnp.float32)                     # (hb, W, C)
        if ragged:
            rows = (pl.program_id(1) * hb
                    + jax.lax.broadcasted_iota(jnp.int32, (hb, 1, 1), 0))
            v = jnp.where(rows < H, v, 0.0)
        acc_ref[...] += jnp.sum(v.reshape(hb * W, C), axis=0, keepdims=True)

        @pl.when(pl.program_id(1) == pl.num_programs(1) - 1)
        def _():
            o_ref[0, 0] = (acc_ref[...] * inv).astype(o_ref.dtype)

    return pl.pallas_call(
        kern,
        out_shape=jax.ShapeDtypeStruct((N, 1, 1, C), x.dtype),
        grid_spec=pltpu.PrefetchScalarGridSpec(
            num_scalar_prefetch=0,
            grid=(N, nh),
            in_specs=[pl.BlockSpec((1, hb, W, C), lambda n, h: (n, h, 0, 0))],
            out_specs=pl.BlockSpec((1, 1, 1, C), lambda n, h: (n, 0, 0, 0)),
            scratch_shapes=[pltpu.VMEM((1, C), jnp.float32)]),
        compiler_params=_cparams("parallel", "arbitrary"),
    )(x)


def maxpool_3x3_s2_p1(x):
    """3x3 stride-2 pad-1 max pool on NHWC; lane-dense (even/odd W packed next to C)."""
    N, H, W, C = x.shape
    Ho = (H - 1) // 2 + 1
    Wo = (W - 1) // 2 + 1
    Hp = H + 2
    w_extra = (W + 2) % 2                       # handle odd padded widths (e.g. 513 inputs)
    Wp2 = (W + 2 + w_extra) // 2
    xp = jnp.pad(x, ((0, 0), (1, 1), (1, 1 + w_extra), (0, 0)),
                 constant_values=-jnp.inf)
    xs = xp.reshape(N, Hp, Wp2, 2 * C)          # pure reshape: even/odd cols packed in lanes

    def kern(r0_ref, r1_ref, r2_ref, o_ref):
        m = None
        for ref in (r0_ref, r1_ref, r2_ref):
            v = ref[0, 0]                        # (Wp2, 2C)
            even, odd = v[:, :C], v[:, C:]
            row = jnp.maximum(jnp.maximum(even[:Wo, :], odd[:Wo, :]),
                              even[1:Wo + 1, :])
            m = row if m is None else jnp.maximum(m, row)
        o_ref[0, 0] = m

    def tap_spec(i):
        return pl.BlockSpec((1, 1, Wp2, 2 * C),
                            lambda n, ho, i=i: (n, 2 * ho + i, 0, 0))

    return pl.pallas_call(
        kern,
        out_shape=jax.ShapeDtypeStruct((N, Ho, Wo, C), x.dtype),
        grid_spec=pltpu.PrefetchScalarGridSpec(
            num_scalar_prefetch=0,
            grid=(N, Ho),
            in_specs=[tap_spec(0), tap_spec(1), tap_spec(2)],
            out_specs=pl.BlockSpec((1, 1, Wo, C), lambda n, ho: (n, ho, 0, 0))),
        compiler_params=_cparams("parallel", "parallel"),
    )(xs, xs, xs)


# ----------------------------------------------------------------------------
# convolution building blocks (NHWC bf16 activations)
# ----------------------------------------------------------------------------
def _bn_scale_shift(sums, sqs, gamma, beta, M, Np):
    s = jnp.sum(sums, axis=(0, 1))                       # (Np,)
    q = jnp.sum(sqs, axis=(0, 1))
    mean = s / M
    # TODO(synk): E[x^2]-E[x]^2 in f32 can cancel for |mean| >> std (fine for He init).
    var = jnp.maximum(q / M - mean * mean, 0.0)
    C = gamma.shape[0]
    gamma_p = jnp.pad(gamma, (0, Np - C))                # zero gamma -> padded cols stay 0
    beta_p = jnp.pad(beta, (0, Np - C))
    scale = gamma_p * jax.lax.rsqrt(var + BN_EPS)
    shift = beta_p - mean * scale
    return (scale.reshape(1, Np).astype(jnp.float32),
            shift.reshape(1, Np).astype(jnp.float32))


def _rows_from_1x1(x, wp, stride):
    """1x1 conv fast path: plain reshape to GEMM rows (no im2col, no transpose)."""
    N, H, W, C = x.shape
    assert C == wp["cin_p"], (C, wp["cin_p"])
    if stride != 1:
        x = x[:, ::stride, ::stride, :]
        N, H, W, C = x.shape
    rows = x.reshape(N * H * W, C)
    Kp = wp["Kp"]
    if C != Kp:                                          # only tiny-channel inputs (converter)
        rows = jnp.pad(rows, ((0, 0), (0, Kp - C)))
    return rows.astype(jnp.bfloat16), (N, H, W)


def _im2col_nhwc(x, wp, stride, padding, dilation):
    """x NHWC -> rows (M, Kp); K ordered (kh, kw, cin_p), K-pad folded into the concat.

    Only used for the 7x7/s2 stem conv and the two 3x3/s2 bottleneck convs.
    TODO(synk): these could also use in-kernel taps (even/odd pre-split like the maxpool).
    """
    N, H, W, C = x.shape
    kh, kw, Kp = wp["kh"], wp["kw"], wp["Kp"]
    assert C == wp["cin_p"], (C, wp["cin_p"])
    xp = jnp.pad(x, ((0, 0), (padding, padding), (padding, padding), (0, 0)))
    Ho = (H + 2 * padding - dilation * (kh - 1) - 1) // stride + 1
    Wo = (W + 2 * padding - dilation * (kw - 1) - 1) // stride + 1
    taps = []
    for i in range(kh):
        for j in range(kw):
            hi, wj = i * dilation, j * dilation
            taps.append(xp[:, hi:hi + stride * (Ho - 1) + 1:stride,
                           wj:wj + stride * (Wo - 1) + 1:stride, :])
    K = kh * kw * C
    if Kp > K:
        taps.append(jnp.zeros((N, Ho, Wo, Kp - K), x.dtype))
    rows = jnp.concatenate(taps, axis=-1).reshape(N * Ho * Wo, Kp)
    return rows.astype(jnp.bfloat16), (N, Ho, Wo)


def _finish_bn_gemm(rows, wp, bn, spatial, in_affine=None):
    M = rows.shape[0]
    assert rows.shape[1] == wp["Kp"], (rows.shape, wp["Kp"])
    y, sums, sqs = matmul_bn(rows, wp["w"], in_affine=in_affine)
    scale, shift = _bn_scale_shift(sums, sqs, bn[0], bn[1], M, wp["Np"])
    n, ho, wo = spatial
    return y, scale, shift, (n, ho, wo, wp["Np"], M)


def conv1x1_bn(x, wp, bn, stride=1):
    rows, spatial = _rows_from_1x1(x, wp, stride)
    return _finish_bn_gemm(rows, wp, bn, spatial)


def conv_im2col_bn(x, wp, bn, stride, padding, dilation=1):
    rows, spatial = _im2col_nhwc(x, wp, stride, padding, dilation)
    return _finish_bn_gemm(rows, wp, bn, spatial)


def conv3x3_bn_s1(x, wp, bn, padding, dilation):
    """Stride-1 3x3 conv (incl. dilated) as an in-kernel 9-tap GEMM: no im2col in HBM.

    Grid = one step per (batch, output row); three row-window operands supply the three
    padded input rows each step; column offsets / weight taps are static slices.
    """
    N, H, W, C = x.shape
    assert wp["kh"] == 3 and wp["kw"] == 3 and C == wp["cin_p"]
    d = dilation
    xp = jnp.pad(x, ((0, 0), (padding, padding), (padding, padding), (0, 0)))
    Hp, Wp = H + 2 * padding, W + 2 * padding
    Ho, Wo = Hp - 2 * d, Wp - 2 * d
    Kp, Np = wp["w"].shape

    def kern(a0_ref, a1_ref, a2_ref, w_ref, o_ref, sum_ref, sq_ref):
        acc = jnp.zeros((Wo, Np), jnp.float32)
        for i, a_ref in enumerate((a0_ref, a1_ref, a2_ref)):
            for j in range(3):
                win = a_ref[0, 0, j * d:j * d + Wo, :]                     # (Wo, C)
                wt = w_ref[(i * 3 + j) * C:(i * 3 + j + 1) * C, :]         # (C, Np)
                acc = acc + jnp.dot(win, wt, preferred_element_type=jnp.float32)
        o_ref[0, 0] = acc.astype(o_ref.dtype)
        sum_ref[0] = jnp.sum(acc, axis=0, keepdims=True)
        sq_ref[0] = jnp.sum(acc * acc, axis=0, keepdims=True)

    def a_spec(i):
        return pl.BlockSpec((1, 1, Wp, C),
                            lambda m, i=i: (m // Ho, m % Ho + i * d, 0, 0))

    y, sums, sqs = pl.pallas_call(
        kern,
        out_shape=(jax.ShapeDtypeStruct((N, Ho, Wo, Np), jnp.bfloat16),
                   jax.ShapeDtypeStruct((N * Ho, 1, Np), jnp.float32),
                   jax.ShapeDtypeStruct((N * Ho, 1, Np), jnp.float32)),
        grid_spec=pltpu.PrefetchScalarGridSpec(
            num_scalar_prefetch=0,
            grid=(N * Ho,),
            in_specs=[a_spec(0), a_spec(1), a_spec(2),
                      pl.BlockSpec((Kp, Np), lambda m: (0, 0))],
            out_specs=[pl.BlockSpec((1, 1, Wo, Np),
                                    lambda m: (m // Ho, m % Ho, 0, 0)),
                       pl.BlockSpec((1, 1, Np), lambda m: (m, 0, 0)),
                       pl.BlockSpec((1, 1, Np), lambda m: (m, 0, 0))]),
        compiler_params=_cparams("parallel"),
    )(xp, xp, xp, wp["w"])

    M = N * Ho * Wo
    scale, shift = _bn_scale_shift(sums, sqs, bn[0], bn[1], M, Np)
    return y.reshape(M, Np), scale, shift, (N, Ho, Wo, Np, M)


def conv_bn_any(x, wp, bn, stride=1, padding=0, dilation=1):
    if wp["kh"] == 1 and wp["kw"] == 1:
        return conv1x1_bn(x, wp, bn, stride)
    if wp["kh"] == 3 and wp["kw"] == 3 and stride == 1:
        return conv3x3_bn_s1(x, wp, bn, padding, dilation)
    return conv_im2col_bn(x, wp, bn, stride, padding, dilation)


def conv_bn_relu(x, wp, bn, **kw):
    y, scale, shift, dims = conv_bn_any(x, wp, bn, **kw)
    act = pallas_affine(y, scale, shift, relu=True)
    n, ho, wo, Np, _ = dims
    return act.reshape(n, ho, wo, Np)


def conv_bias(x, wp, bias_p, out_dtype):
    rows, (n, ho, wo) = _rows_from_1x1(x, wp, 1)
    y = matmul_bias(rows, wp["w"], bias_p, out_dtype)
    return y.reshape(n, ho, wo, wp["Np"])


def _interp_matrix(in_size, out_size):
    """Separable bilinear interpolation matrix, PyTorch align_corners=False."""
    i = jnp.arange(out_size, dtype=jnp.float32)
    scale = in_size / out_size
    src = jnp.maximum((i + 0.5) * scale - 0.5, 0.0)
    i0 = jnp.minimum(jnp.floor(src).astype(jnp.int32), in_size - 1)
    i1 = jnp.minimum(i0 + 1, in_size - 1)
    w1 = src - i0.astype(jnp.float32)
    w0 = 1.0 - w1
    R = jnp.zeros((out_size, in_size), jnp.float32)
    R = R.at[jnp.arange(out_size), i0].add(w0)
    R = R.at[jnp.arange(out_size), i1].add(w1)
    return R


def bilinear_resize_nhwc(x, out_h, out_w):
    """Exact bilinear (align_corners=False), tiny matrices -> plain XLA einsums."""
    Rh = _interp_matrix(x.shape[1], out_h)
    Rw = _interp_matrix(x.shape[2], out_w)
    y = jnp.einsum("ph,nhwc->npwc", Rh, x.astype(jnp.float32))
    return jnp.einsum("qw,npwc->npqc", Rw, y)


# ----------------------------------------------------------------------------
# parameter initialization (deterministic, synthetic) with hoisted weight prep
# ----------------------------------------------------------------------------
def _conv_init(key, cout, cin, kh, kw):
    fan_in = cin * kh * kw
    return jax.random.normal(key, (cout, cin, kh, kw), jnp.float32) * (2.0 / fan_in) ** 0.5


def _prep_conv(w, cin_pad_to=None):
    """PyTorch-layout weight -> padded bf16 (Kp, Np) GEMM operand, K ordered (kh,kw,cin)."""
    cout, cin, kh, kw = w.shape
    cin_p = cin if cin_pad_to is None else cin_pad_to
    if cin_p != cin:
        w = jnp.pad(w, ((0, 0), (0, cin_p - cin), (0, 0), (0, 0)))
    K = cin_p * kh * kw
    Kp = 128 if K <= 128 else _ceil_to(K, 256)           # tk never falls back to 128
    Np = _ceil_to(cout, 128)
    wmat = jnp.transpose(w, (2, 3, 1, 0)).reshape(K, cout)
    wmat = jnp.pad(wmat, ((0, Kp - K), (0, Np - cout))).astype(jnp.bfloat16)
    return {"w": wmat, "K": K, "Kp": Kp, "N": cout, "Np": Np,
            "kh": kh, "kw": kw, "cin": cin, "cin_p": cin_p}


def _prep_bias(b, Np):
    return jnp.pad(b, (0, Np - b.shape[0])).reshape(1, Np).astype(jnp.float32)


def _bn_init(c):
    return (jnp.ones((c,), jnp.float32), jnp.zeros((c,), jnp.float32))


def init_params(key, in_channels, out_channels, assp_out=256):
    keys = iter(jax.random.split(key, 128))
    nk = lambda: next(keys)
    p = {}
    p["cc"] = _prep_conv(_conv_init(nk(), 3, in_channels, 1, 1))
    p["cc_b"] = _prep_bias(jax.random.normal(nk(), (3,), jnp.float32) * 0.1,
                           p["cc"]["Np"])

    rn = {"conv1": _prep_conv(_conv_init(nk(), 64, 3, 7, 7)), "bn1": _bn_init(64)}

    def make_layer(inplanes, planes, blocks):
        layer = []
        for b in range(blocks):
            blk = {"w1": _prep_conv(_conv_init(nk(), planes, inplanes, 1, 1),
                                    _ceil_to(inplanes, 128)),
                   "bn1": _bn_init(planes),
                   "w2": _prep_conv(_conv_init(nk(), planes, planes, 3, 3),
                                    _ceil_to(planes, 128)),
                   "bn2": _bn_init(planes),
                   "w3": _prep_conv(_conv_init(nk(), planes * 4, planes, 1, 1),
                                    _ceil_to(planes, 128)),
                   "bn3": _bn_init(planes * 4)}
            if b == 0:
                blk["wd"] = _prep_conv(_conv_init(nk(), planes * 4, inplanes, 1, 1),
                                       _ceil_to(inplanes, 128))
                blk["bnd"] = _bn_init(planes * 4)
            layer.append(blk)
            inplanes = planes * 4
        return layer, inplanes

    inpl = 64
    rn["layer1"], inpl = make_layer(inpl, 64, 3)
    rn["layer2"], inpl = make_layer(inpl, 128, 4)
    rn["layer3"], inpl = make_layer(inpl, 256, 6)
    p["resnet"] = rn

    ap = {}
    ap["w1"], ap["bn1"] = _prep_conv(_conv_init(nk(), assp_out, 1024, 1, 1), 1024), _bn_init(assp_out)
    ap["w2"], ap["bn2"] = _prep_conv(_conv_init(nk(), assp_out, 1024, 3, 3), 1024), _bn_init(assp_out)
    ap["w3"], ap["bn3"] = _prep_conv(_conv_init(nk(), assp_out, 1024, 3, 3), 1024), _bn_init(assp_out)
    ap["w4"], ap["bn4"] = _prep_conv(_conv_init(nk(), assp_out, 1024, 3, 3), 1024), _bn_init(assp_out)
    ap["w5"], ap["bn5"] = _prep_conv(_conv_init(nk(), assp_out, 1024, 1, 1), 1024), _bn_init(assp_out)
    ap["wf"], ap["bnf"] = _prep_conv(_conv_init(nk(), assp_out, assp_out * 5, 1, 1),
                                     assp_out * 5), _bn_init(assp_out)
    p["assp"] = ap

    p["head"] = _prep_conv(_conv_init(nk(), out_channels, 256, 1, 1), 256)
    p["head_b"] = _prep_bias(jax.random.normal(nk(), (out_channels,), jnp.float32) * 0.1,
                             p["head"]["Np"])
    return p


# ----------------------------------------------------------------------------
# forward passes (activations NHWC bf16, channels padded to multiples of 128)
# ----------------------------------------------------------------------------
def bottleneck_forward(x, blk, stride):
    n_in, h_in, w_in, c_in = x.shape
    # 1x1 reduce + BN + ReLU (activation materialized: needed zero-padded for the 3x3)
    y1, s1, b1, d1 = conv1x1_bn(x, blk["w1"], blk["bn1"])
    a1 = pallas_affine(y1, s1, b1, relu=True).reshape(d1[0], d1[1], d1[2], d1[3])
    # 3x3 conv: in-kernel tap GEMM for stride 1, im2col fallback for the stride-2 blocks
    if stride == 1:
        y2, s2, b2, d2 = conv3x3_bn_s1(a1, blk["w2"], blk["bn2"], padding=1, dilation=1)
    else:
        y2, s2, b2, d2 = conv_im2col_bn(a1, blk["w2"], blk["bn2"], stride, 1, 1)
    # 1x1 expand with the previous BN+ReLU fused into the A-tile prologue
    y3, s3, b3, d3 = _finish_bn_gemm(y2, blk["w3"], blk["bn3"], d2[:3],
                                     in_affine=(s2, b2))
    if "wd" in blk:
        yd, sd, bd, _ = conv1x1_bn(x, blk["wd"], blk["bnd"], stride=stride)
        idn = pallas_affine(yd, sd, bd, relu=False)
    else:
        idn = x.reshape(n_in * h_in * w_in, c_in)      # no pad copy: widths already match
    out = pallas_affine(y3, s3, b3, residual=idn, relu=True)   # fused BN + add + ReLU
    n, ho, wo, Np, _ = d3
    return out.reshape(n, ho, wo, Np)


def resnet50_layer13_forward(x, rn):
    x = conv_bn_relu(x, rn["conv1"], rn["bn1"], stride=2, padding=3)
    x = maxpool_3x3_s2_p1(x)
    for layer_name, stride in (("layer1", 1), ("layer2", 2), ("layer3", 2)):
        for b, blk in enumerate(rn[layer_name]):
            x = bottleneck_forward(x, blk, stride if b == 0 else 1)
    return x


def assp_forward(x, ap):
    # TODO(synk): the three dilated branches could share one input-row load per kernel
    #             step (3x less ASPP input traffic); currently each branch reads x itself.
    x1 = conv_bn_relu(x, ap["w1"], ap["bn1"])
    x2 = conv_bn_relu(x, ap["w2"], ap["bn2"], padding=6, dilation=6)
    x3 = conv_bn_relu(x, ap["w3"], ap["bn3"], padding=12, dilation=12)
    x4 = conv_bn_relu(x, ap["w4"], ap["bn4"], padding=18, dilation=18)
    x5 = pallas_global_avgpool(x)
    x5 = conv_bn_relu(x5, ap["w5"], ap["bn5"])
    x5 = bilinear_resize_nhwc(x5, x4.shape[1], x4.shape[2]).astype(x4.dtype)
    xc = jnp.concatenate([x1, x2, x3, x4, x5], axis=-1)
    return conv_bn_relu(xc, ap["wf"], ap["bnf"])


def deeplabv3_forward(x_nchw, params, out_channels):
    _, _, h, w = x_nchw.shape
    x = jnp.transpose(x_nchw, (0, 2, 3, 1)).astype(jnp.bfloat16)       # NCHW -> NHWC
    x = conv_bias(x, params["cc"], params["cc_b"], out_dtype=jnp.bfloat16)
    x = x[..., :3]                                                     # converter true channels
    x = resnet50_layer13_forward(x, params["resnet"])
    x = assp_forward(x, params["assp"])
    x = conv_bias(x, params["head"], params["head_b"], out_dtype=jnp.float32)
    x = x[..., :out_channels]
    x = bilinear_resize_nhwc(x, h, w)
    return jnp.transpose(x, (0, 3, 1, 2))                              # NHWC -> NCHW


# ----------------------------------------------------------------------------
if __name__ == "__main__":
    key = jax.random.PRNGKey(0)
    k_x, k_p = jax.random.split(key)

    in_channels, out_channels = 4, 8
    batch, spatial = 2, 32                     # 32 -> layer3 / ASPP features at 2x2
    x = jax.random.normal(k_x, (batch, in_channels, spatial, spatial), jnp.float32)

    params = init_params(k_p, in_channels, out_channels)

    y = deeplabv3_forward(x, params, out_channels)
    y = jax.block_until_ready(y)

    assert y.shape == (batch, out_channels, spatial, spatial), y.shape
    assert bool(jnp.all(jnp.isfinite(y)))
    print("KERNEL_OK")
</pallas_src>

<mosaic_0001>
module attributes {stable_mosaic.version = 11 : i64} {
  func.func @_mm_bias_kernel(%arg0: i32, %arg1: i32, %arg2: i32, %arg3: memref<512x128xbf16, #tpu.memory_space<vmem>>, %arg4: memref<128x128xbf16, #tpu.memory_space<vmem>>, %arg5: memref<1x128xf32, #tpu.memory_space<vmem>>, %arg6: memref<512x128xbf16, #tpu.memory_space<vmem>>, %arg7: memref<512x128xf32, #tpu.memory_space<vmem>>) attributes {dimension_semantics = [#tpu.dimension_semantics<parallel>, #tpu.dimension_semantics<parallel>, #tpu.dimension_semantics<arbitrary>], iteration_bounds = array<i64: 4, 1, 1>, scalar_prefetch = 0 : i64, scratch_operands = 1 : i64, tpu.core_type = #tpu.core_type<tc>, window_params = [{transform_indices = @transform_0, window_bounds = array<i64: 512, 128>}, {transform_indices = @transform_1, window_bounds = array<i64: 128, 128>}, {transform_indices = @transform_2, window_bounds = array<i64: 1, 128>}, {transform_indices = @transform_3, window_bounds = array<i64: 512, 128>}]} {
    %c0_i32 = arith.constant 0 : i32
    %0 = arith.cmpi eq, %arg2, %c0_i32 : i32
    %1 = arith.extui %0 : i1 to i32
    %c0_i32_0 = arith.constant 0 : i32
    %2 = arith.cmpi ne, %1, %c0_i32_0 : i32
    scf.if %2 {
      %cst_10 = arith.constant 0.000000e+00 : f32
      %12 = vector.broadcast %cst_10 : f32 to vector<512x128xf32>
      %c0_11 = arith.constant 0 : index
      %c0_12 = arith.constant 0 : index
      %13 = vector.load %arg7[%c0_11, %c0_12] : memref<512x128xf32, #tpu.memory_space<vmem>>, vector<512x128xf32>
      tpu.vector_store %arg7[%c0_11, %c0_12], %12 {strides = array<i32>} : memref<512x128xf32, #tpu.memory_space<vmem>>, vector<512x128xf32>,
    } else {
    }
    %c0 = arith.constant 0 : index
    %c0_1 = arith.constant 0 : index
    %3 = vector.load %arg7[%c0, %c0_1] : memref<512x128xf32, #tpu.memory_space<vmem>>, vector<512x128xf32>
    %c0_2 = arith.constant 0 : index
    %c0_3 = arith.constant 0 : index
    %4 = vector.load %arg3[%c0_2, %c0_3] : memref<512x128xbf16, #tpu.memory_space<vmem>>, vector<512x128xbf16>
    %c0_4 = arith.constant 0 : index
    %c0_5 = arith.constant 0 : index
    %5 = vector.load %arg4[%c0_4, %c0_5] : memref<128x128xbf16, #tpu.memory_space<vmem>>, vector<128x128xbf16>
    %cst = arith.constant dense<0.000000e+00> : vector<512x128xf32>
    %6 = tpu.matmul %4, %5, %cst {dimension_numbers = #tpu.dot_dimension_numbers<[1], [0], [0], [1], [0, 0, 1, 1], [], []>} : vector<512x128xbf16>, vector<128x128xbf16>, vector<512x128xf32> -> vector<512x128xf32>
    %7 = arith.addf %3, %6 : vector<512x128xf32>
    %c0_6 = arith.constant 0 : index
    %c0_7 = arith.constant 0 : index
    %8 = vector.load %arg7[%c0_6, %c0_7] : memref<512x128xf32, #tpu.memory_space<vmem>>, vector<512x128xf32>
    tpu.vector_store %arg7[%c0_6, %c0_7], %7 {strides = array<i32>} : memref<512x128xf32, #tpu.memory_space<vmem>>, vector<512x128xf32>,
    %c0_i32_8 = arith.constant 0 : i32
    %9 = arith.cmpi eq, %arg2, %c0_i32_8 : i32
    %10 = arith.extui %9 : i1 to i32
    %c0_i32_9 = arith.constant 0 : i32
    %11 = arith.cmpi ne, %10, %c0_i32_9 : i32
    scf.if %11 {
      %c0_10 = arith.constant 0 : index
      %c0_11 = arith.constant 0 : index
      %12 = vector.load %arg7[%c0_10, %c0_11] : memref<512x128xf32, #tpu.memory_space<vmem>>, vector<512x128xf32>
      %c0_12 = arith.constant 0 : index
      %c0_13 = arith.constant 0 : index
      %13 = vector.load %arg5[%c0_12, %c0_13] : memref<1x128xf32, #tpu.memory_space<vmem>>, vector<1x128xf32>
      %14 = vector.broadcast %13 : vector<1x128xf32> to vector<512x128xf32>
      %15 = arith.addf %12, %14 : vector<512x128xf32>
      %16 = arith.truncf %15 : vector<512x128xf32> to vector<512x128xbf16>
      %c0_14 = arith.constant 0 : index
      %c0_15 = arith.constant 0 : index
      %17 = vector.load %arg6[%c0_14, %c0_15] : memref<512x128xbf16, #tpu.memory_space<vmem>>, vector<512x128xbf16>
      tpu.vector_store %arg6[%c0_14, %c0_15], %16 {strides = array<i32>} : memref<512x128xbf16, #tpu.memory_space<vmem>>, vector<512x128xbf16>,
    } else {
    }
    return
  }
  func.func @transform_0(%arg0: i32, %arg1: i32, %arg2: i32) -> (i32, i32) {
    %c0_i32 = arith.constant 0 : i32
    return %arg0, %arg2 : i32, i32
  }
  func.func @transform_1(%arg0: i32, %arg1: i32, %arg2: i32) -> (i32, i32) {
    %c0_i32 = arith.constant 0 : i32
    return %arg2, %arg1 : i32, i32
  }
  func.func @transform_2(%arg0: i32, %arg1: i32, %arg2: i32) -> (i32, i32) {
    %c0_i32 = arith.constant 0 : i32
    %c0_i32_0 = arith.constant 0 : i32
    return %c0_i32, %arg1 : i32, i32
  }
  func.func @transform_3(%arg0: i32, %arg1: i32, %arg2: i32) -> (i32, i32) {
    %c0_i32 = arith.constant 0 : i32
    return %arg0, %arg1 : i32, i32
  }
}

</mosaic_0001>

<llo_original>
// kernel: tpu_custom_call.1
$region0: #{tpu_custom_call.1}
  #allocation0 [shape = 'u32[]', space=smem, size = 0x4, offset = 0x4, fixed_abs, tag = 'smem constant byte address 0x4 - core index']
  #allocation1 [shape = 'u32[144,128]{1,0:T(1,128)}', space=vmem, size = 0x12000, scoped, tag = 'internal scratch']
  #allocation2 [shape = 'f32[512,128]{1,0:T(8,128)}', space=vmem, size = 0x40000, scoped, tag = 'scratch operand']
  %s0 = inlined_call_operand.hbm [shape: bf16[2048,128], index: 0, kind: input, shape index: {}]
  %s1 = inlined_call_operand.hbm [shape: bf16[128,128], index: 1, kind: input, shape index: {}]
  %s2 = inlined_call_operand.vmem [shape: f32[1,128], index: 2, kind: input, shape index: {}]
  %s3 = inlined_call_operand.hbm [shape: bf16[2048,128], index: 3, kind: output, shape index: {}]
  %s4 = sld [smem:[#allocation0]]
  $region61: #{tpu_custom_call.1} parent=0
    _
  %s6 = ssub.s32 1, %s4
  %s7 = scalar_select 0, %s6, %s4
  $region1: #{tpu_custom_call.1} parent=0
    #allocation3 [shape = 'u8[262144]{0}', space=vmem, size = 0x40000, scoped, tag = 'input window, operand 0']
    #allocation4 [shape = 's32[2]{0}', space=sflag, size = 0x8, scoped, tag = 'scoped memory for tpu_custom_call.1']
    #allocation5 [shape = 's32[2]{0}', space=sflag, size = 0x8, scoped, tag = 'scoped memory for tpu_custom_call.1']
    #allocation6 [shape = 'u8[32768]{0}', space=vmem, size = 0x8000, scoped, tag = 'input window, operand 1, single buffered']
    #allocation7 [shape = 's32[1]{0}', space=sflag, size = 0x4, scoped, tag = 'scoped memory for tpu_custom_call.1']
    #allocation8 [shape = 'u8[262144]{0}', space=vmem, size = 0x40000, scoped, tag = 'output window, operand 0']
    %8 = vsyncpa [#allocation4], 0
    %s9 = scalar_lea.sflag [#allocation4], 1
    %10 = vsyncpa %s9, 0
    %11 = vsyncpa [#allocation7], 0
    %12 = vsyncpa [#allocation5], 0
    %s13 = scalar_lea.sflag [#allocation5], 1
    %14 = vsyncpa %s13, 0
    loop: start=0, step=1, limit=6
    $region2: #{tpu_custom_call.1} parent=1 // loop_pre_header
      _
    $region3: #{tpu_custom_call.1} parent=1 // loop_header
      %s16 = sphi 0, %s20
      %p17 = scmp.ge.s32.totalorder %s16, 6
      %s23 = sphi 0, %s42
      %s24 = sphi 0, %s38
      %s25 = sphi 0, %s34
      %s26 = sphi 0, %s23
      %s27 = sphi 0, %s24
      %s28 = sphi 0, %s25
      %s29 = sphi 0, %s26
      %s30 = sphi 0, %s27
      %s31 = sphi 0, %s28
      %s47 = sphi 0, %s49
      %s50 = sphi 0, %s47
      %s51 = sphi 0, %s50
      %s67 = sphi 0, %s51
      %s75 = sphi 0, %s77
      %s78 = sphi 0, %s75
      %s79 = sphi 0, %s78
      %s95 = sphi 0, %s79
      %s101 = sphi 0, %s103
      %s104 = sphi 0, %s101
      %s105 = sphi 0, %s104
      %s121 = sphi 0, %s105
      %s129 = sphi 0, %s131
      %s132 = sphi 0, %s129
      %s133 = sphi 0, %s132
      %s149 = sphi 0, %s133
    $region4: #{tpu_custom_call.1} parent=1 // loop_header_branch
      %19 = sbr.rel (%p17) target = $region8
    $region5: #{tpu_custom_call.1} parent=1 // loop_body
      %s21 = ssub.s32 %s16, 1
      %s22 = ssub.s32 %s16, 2
      %s32 = sadd.s32 1, %s25
      %p33 = scmp.ge.s32.totalorder %s32, 1
      %s34 = scalar_select %p33, 0, %s32
      %s35 = sadd.s32 1, %s24
      %s36 = scalar_select %p33, %s35, %s24
      %p37 = scmp.ge.s32.totalorder %s36, 1
      %s38 = scalar_select %p37, 0, %s36
      %s39 = sadd.s32 1, %s23
      %s40 = scalar_select %p37, %s39, %s23
      %p41 = scmp.ge.s32.totalorder %s40, 4
      %s42 = scalar_select %p41, 0, %s40
      %s43 = ssub.s32 %s23, %s42
      %s44 = ssub.s32 %s25, %s34
      %s45 = sor.u32 %s43, %s44
      %p46 = scmp.eq.s32.totalorder %s45, 0
      %s48 = sadd.s32 %s47, 1
      %s49 = scalar_select %p46, %s47, %s48
      %p52 = pneg %p46
      %p53 = scmp.eq.s32.totalorder %s16, 3
      %p54 = por %p52, %p53
      %p55 = scmp.ne.s32.totalorder %s47, %s50
      %p56 = scmp.eq.s32.totalorder %s16, 0
      %p57 = por %p55, %p56
      %p58 = scmp.ne.s32.totalorder %s47, %s50
      %p59 = scmp.eq.s32.totalorder %s21, 3
      %p60 = por %p58, %p59
      %p61 = scmp.ne.s32.totalorder %s50, %s51
      %p62 = scmp.eq.s32.totalorder %s21, 0
      %p63 = por %p61, %p62
      %p64 = scmp.ne.s32.totalorder %s50, %s51
      %p65 = scmp.eq.s32.totalorder %s22, 3
      %p66 = por %p64, %p65
      %p68 = scmp.ne.s32.totalorder %s51, %s67
      %p69 = scmp.eq.s32.totalorder %s22, 0
      %p70 = por %p68, %p69
      %s71 = ssub.s32 %s25, %s34
      %s72 = ssub.s32 %s24, %s38
      %s73 = sor.u32 %s71, %s72
      %p74 = scmp.eq.s32.totalorder %s73, 0
      %s76 = sadd.s32 %s75, 1
      %s77 = scalar_select %p74, %s75, %s76
      %p80 = pneg %p74
      %p81 = scmp.eq.s32.totalorder %s16, 3
      %p82 = por %p80, %p81
      %p83 = scmp.ne.s32.totalorder %s75, %s78
      %p84 = scmp.eq.s32.totalorder %s16, 0
      %p85 = por %p83, %p84
      %p86 = scmp.ne.s32.totalorder %s75, %s78
      %p87 = scmp.eq.s32.totalorder %s21, 3
      %p88 = por %p86, %p87
      %p89 = scmp.ne.s32.totalorder %s78, %s79
      %p90 = scmp.eq.s32.totalorder %s21, 0
      %p91 = por %p89, %p90
      %p92 = scmp.ne.s32.totalorder %s78, %s79
      %p93 = scmp.eq.s32.totalorder %s22, 3
      %p94 = por %p92, %p93
      %p96 = scmp.ne.s32.totalorder %s79, %s95
      %p97 = scmp.eq.s32.totalorder %s22, 0
      %p98 = por %p96, %p97
      %s99 = ssub.s32 %s24, %s38
      %p100 = scmp.eq.s32.totalorder %s99, 0
      %s102 = sadd.s32 %s101, 1
      %s103 = scalar_select %p100, %s101, %s102
      %p106 = pneg %p100
      %p107 = scmp.eq.s32.totalorder %s16, 3
      %p108 = por %p106, %p107
      %p109 = scmp.ne.s32.totalorder %s101, %s104
      %p110 = scmp.eq.s32.totalorder %s16, 0
      %p111 = por %p109, %p110
      %p112 = scmp.ne.s32.totalorder %s101, %s104
      %p113 = scmp.eq.s32.totalorder %s21, 3
      %p114 = por %p112, %p113
      %p115 = scmp.ne.s32.totalorder %s104, %s105
      %p116 = scmp.eq.s32.totalorder %s21, 0
      %p117 = por %p115, %p116
      %p118 = scmp.ne.s32.totalorder %s104, %s105
      %p119 = scmp.eq.s32.totalorder %s22, 3
      %p120 = por %p118, %p119
      %p122 = scmp.ne.s32.totalorder %s105, %s121
      %p123 = scmp.eq.s32.totalorder %s22, 0
      %p124 = por %p122, %p123
      %s125 = ssub.s32 %s23, %s42
      %s126 = ssub.s32 %s24, %s38
      %s127 = sor.u32 %s125, %s126
      %p128 = scmp.eq.s32.totalorder %s127, 0
      %s130 = sadd.s32 %s129, 1
      %s131 = scalar_select %p128, %s129, %s130
      %p134 = pneg %p128
      %p135 = scmp.eq.s32.totalorder %s16, 3
      %p136 = por %p134, %p135
      %p137 = scmp.ne.s32.totalorder %s129, %s132
      %p138 = scmp.eq.s32.totalorder %s16, 0
      %p139 = por %p137, %p138
      %p140 = scmp.ne.s32.totalorder %s129, %s132
      %p141 = scmp.eq.s32.totalorder %s21, 3
      %p142 = por %p140, %p141
      %p143 = scmp.ne.s32.totalorder %s132, %s133
      %p144 = scmp.eq.s32.totalorder %s21, 0
      %p145 = por %p143, %p144
      %p146 = scmp.ne.s32.totalorder %s132, %s133
      %p147 = scmp.eq.s32.totalorder %s22, 3
      %p148 = por %p146, %p147
      %p150 = scmp.ne.s32.totalorder %s133, %s149
      %p151 = scmp.eq.s32.totalorder %s22, 0
      %p152 = por %p150, %p151
      %p153 = scmp.le.s32.totalorder 1, %s16
      %p154 = scmp.lt.s32.totalorder %s16, 5
      %p155 = pnand %p153, %p154
      %p156 = pneg %p155
      // Predicated region
      $region9: #{tpu_custom_call.1} parent=5 // pred_check
        _
      $region10: #{tpu_custom_call.1} parent=5 // pred_check_branch
        %158 = sbr.rel (%p155) target = $region12
      $region11: #{tpu_custom_call.1} parent=5 // pred_region
        %s159 = ssub.s32 %s16, 1
        // Predicated region
        $region13: #{tpu_custom_call.1} parent=11 // pred_check
          %p160 = pneg %p91
        $region14: #{tpu_custom_call.1} parent=11 // pred_check_branch
          %162 = sbr.rel (%p160) target = $region16
        $region15: #{tpu_custom_call.1} parent=11 // pred_region
          %s163 = smul.u32 16, %s28
          %s165 = ssub.s32 1024, 1024
          %166 = vsyncadd [#allocation7], %s165
          %s167 = sadd.s32 %s27, %s163
          %s168 = smul.addr %s167, 64
          %s169 = scalar_lea.hbm %s1, %s168
          %s170 = sshll.u32 [#allocation6], 4
          %s171 = int_to_ptr.vmem [resolvable:$true] %s170
          %176 = dma.hbm_to_vmem [thread:$0]  %s169, 1024, %s171, [#allocation7], 64, 64, 4
        $region16: #{tpu_custom_call.1} parent=11 // pred_fallthru
          _
        // Predicated region
        $region17: #{tpu_custom_call.1} parent=11 // pred_check
          %p177 = pneg %p117
        $region18: #{tpu_custom_call.1} parent=11 // pred_check_branch
          %179 = sbr.rel (%p177) target = $region20
        $region19: #{tpu_custom_call.1} parent=11 // pred_region
          %p180 = scmp.lt.s32.totalorder %s27, 0
          %s181 = scalar_select %p180, %s27, 0
          %s182 = scalar_lea.vmem %s2, %s181
        $region20: #{tpu_custom_call.1} parent=11 // pred_fallthru
          _
      $region12: #{tpu_custom_call.1} parent=5 // pred_fallthru
        _
      %p183 = scmp.lt.s32.totalorder %s16, 4
      // Predicated region
      $region21: #{tpu_custom_call.1} parent=5 // pred_check
        %p184 = pneg %p183
      $region22: #{tpu_custom_call.1} parent=5 // pred_check_branch
        %186 = sbr.rel (%p184) target = $region24
      $region23: #{tpu_custom_call.1} parent=5 // pred_region
        // Predicated region
        $region25: #{tpu_custom_call.1} parent=23 // pred_check
          %p187 = pneg %p57
        $region26: #{tpu_custom_call.1} parent=23 // pred_check_branch
          %189 = sbr.rel (%p187) target = $region28
        $region27: #{tpu_custom_call.1} parent=23 // pred_region
          %s190 = sand.u32 %s47, 1
          %s191 = scalar_lea.sflag [#allocation4], %s190
          %s192 = sand.u32 %s47, 1
          %s193 = smul.addr %s192, 256
          %s194 = scalar_lea.vmem [#allocation3], %s193
          %s195 = smul.u32 64, %s23
          %s197 = ssub.s32 4096, 4096
          %198 = vsyncadd %s191, %s197
          %s199 = sadd.s32 %s25, %s195
          %s200 = smul.addr %s199, 64
          %s201 = scalar_lea.hbm %s0, %s200
          %s202 = sshll.u32 %s194, 4
          %s203 = int_to_ptr.vmem [resolvable:$true] %s202
          %208 = dma.hbm_to_vmem [thread:$0]  %s201, 4096, %s203, %s191, 64, 64, 4
        $region28: #{tpu_custom_call.1} parent=23 // pred_fallthru
          _
      $region24: #{tpu_custom_call.1} parent=5 // pred_fallthru
        _
      %p209 = scmp.le.s32.totalorder 1, %s16
      %p210 = scmp.lt.s32.totalorder %s16, 5
      %p211 = pnand %p209, %p210
      %p212 = pneg %p211
      // Predicated region
      $region29: #{tpu_custom_call.1} parent=5 // pred_check
        _
      $region30: #{tpu_custom_call.1} parent=5 // pred_check_branch
        %214 = sbr.rel (%p211) target = $region32
      $region31: #{tpu_custom_call.1} parent=5 // pred_region
        %s215 = ssub.s32 %s16, 1
        %s216 = sand.u32 %s50, 1
        %s217 = scalar_lea.sflag [#allocation4], %s216
        %s218 = sand.u32 %s50, 1
        %s219 = smul.addr %s218, 256
        %s220 = scalar_lea.vmem [#allocation3], %s219
        // Predicated region
        $region33: #{tpu_custom_call.1} parent=31 // pred_check
          %p221 = pneg %p63
        $region34: #{tpu_custom_call.1} parent=31 // pred_check_branch
          %223 = sbr.rel (%p221) target = $region36
        $region35: #{tpu_custom_call.1} parent=31 // pred_region
          %224 = dma.done %s217, 4096
        $region36: #{tpu_custom_call.1} parent=31 // pred_fallthru
          _
        // Predicated region
        $region37: #{tpu_custom_call.1} parent=31 // pred_check
          %p225 = pneg %p91
        $region38: #{tpu_custom_call.1} parent=31 // pred_check_branch
          %227 = sbr.rel (%p225) target = $region40
        $region39: #{tpu_custom_call.1} parent=31 // pred_region
          %228 = dma.done [#allocation7], 1024
        $region40: #{tpu_custom_call.1} parent=31 // pred_fallthru
          _
        %s229 = sand.u32 %s50, 1
        %s230 = scalar_lea.sflag [#allocation4], %s229
        %s231 = sand.u32 %s50, 1
        %s232 = smul.addr %s231, 256
        %s233 = scalar_lea.vmem [#allocation3], %s232
        %p234 = pneg %p63
        %p235 = pneg %p60
        %p236 = pneg %p91
        %p237 = pneg %p88
        %p238 = scmp.lt.s32.totalorder %s27, 0
        %s239 = scalar_select %p238, %s27, 0
        %s240 = scalar_lea.vmem %s2, %s239
        %p241 = pneg %p117
        %p242 = pneg %p114
        %p243 = pneg %p145
        %p244 = pneg %p142
        %s245 = sand.u32 %s132, 1
        %s246 = scalar_lea.sflag [#allocation5], %s245
        %s247 = sand.u32 %s132, 1
        %s248 = smul.addr %s247, 256
        %s249 = scalar_lea.vmem [#allocation8], %s248
        %s250 = smul.u32 64, %s26
        %s251 = smul.u32 16, %s28
        %p252 = scmp.lt.s32.totalorder %s27, 0
        %s253 = scalar_select %p252, %s27, 0
        %s254 = scalar_lea.vmem %s2, %s253
        %s255 = smul.u32 64, %s26
        %p257 = scmp.eq.s32.totalorder %s28, 0
        // Predicated region
        $region41: #{tpu_custom_call.1} parent=31 // pred_check
          %p258 = pneg %p257
        $region42: #{tpu_custom_call.1} parent=31 // pred_check_branch
          %260 = sbr.rel (%p258) target = $region44
        $region43: #{tpu_custom_call.1} parent=31 // pred_region
          %261 = vst [vmem:[#allocation2] sm:$0xff] 0.0
          %262 = vst [vmem:[#allocation2 + $0x8] sm:$0xff] 0.0
          %263 = vst [vmem:[#allocation2 + $0x10] sm:$0xff] 0.0
          %264 = vst [vmem:[#allocation2 + $0x18] sm:$0xff] 0.0
          %265 = vst [vmem:[#allocation2 + $0x20] sm:$0xff] 0.0
          %266 = vst [vmem:[#allocation2 + $0x28] sm:$0xff] 0.0
          %267 = vst [vmem:[#allocation2 + $0x30] sm:$0xff] 0.0
          %268 = vst [vmem:[#allocation2 + $0x38] sm:$0xff] 0.0
          %269 = vst [vmem:[#allocation2 + $0x40] sm:$0xff] 0.0
          %270 = vst [vmem:[#allocation2 + $0x48] sm:$0xff] 0.0
          %271 = vst [vmem:[#allocation2 + $0x50] sm:$0xff] 0.0
          %272 = vst [vmem:[#allocation2 + $0x58] sm:$0xff] 0.0
          %273 = vst [vmem:[#allocation2 + $0x60] sm:$0xff] 0.0
          %274 = vst [vmem:[#allocation2 + $0x68] sm:$0xff] 0.0
          %275 = vst [vmem:[#allocation2 + $0x70] sm:$0xff] 0.0
          %276 = vst [vmem:[#allocation2 + $0x78] sm:$0xff] 0.0
          %277 = vst [vmem:[#allocation2 + $0x80] sm:$0xff] 0.0
          %278 = vst [vmem:[#allocation2 + $0x88] sm:$0xff] 0.0
          %279 = vst [vmem:[#allocation2 + $0x90] sm:$0xff] 0.0
          %280 = vst [vmem:[#allocation2 + $0x98] sm:$0xff] 0.0
          %281 = vst [vmem:[#allocation2 + $0xa0] sm:$0xff] 0.0
          %282 = vst [vmem:[#allocation2 + $0xa8] sm:$0xff] 0.0
          %283 = vst [vmem:[#allocation2 + $0xb0] sm:$0xff] 0.0
          %284 = vst [vmem:[#allocation2 + $0xb8] sm:$0xff] 0.0
          %285 = vst [vmem:[#allocation2 + $0xc0] sm:$0xff] 0.0
          %286 = vst [vmem:[#allocation2 + $0xc8] sm:$0xff] 0.0
          %287 = vst [vmem:[#allocation2 + $0xd0] sm:$0xff] 0.0
          %288 = vst [vmem:[#allocation2 + $0xd8] sm:$0xff] 0.0
          %289 = vst [vmem:[#allocation2 + $0xe0] sm:$0xff] 0.0
          %290 = vst [vmem:[#allocation2 + $0xe8] sm:$0xff] 0.0
          %291 = vst [vmem:[#allocation2 + $0xf0] sm:$0xff] 0.0
          %292 = vst [vmem:[#allocation2 + $0xf8] sm:$0xff] 0.0
          %293 = vst [vmem:[#allocation2 + $0x100] sm:$0xff] 0.0
          %294 = vst [vmem:[#allocation2 + $0x108] sm:$0xff] 0.0
          %295 = vst [vmem:[#allocation2 + $0x110] sm:$0xff] 0.0
          %296 = vst [vmem:[#allocation2 + $0x118] sm:$0xff] 0.0
          %297 = vst [vmem:[#allocation2 + $0x120] sm:$0xff] 0.0
          %298 = vst [vmem:[#allocation2 + $0x128] sm:$0xff] 0.0
          %299 = vst [vmem:[#allocation2 + $0x130] sm:$0xff] 0.0
          %300 = vst [vmem:[#allocation2 + $0x138] sm:$0xff] 0.0
          %301 = vst [vmem:[#allocation2 + $0x140] sm:$0xff] 0.0
          %302 = vst [vmem:[#allocation2 + $0x148] sm:$0xff] 0.0
          %303 = vst [vmem:[#allocation2 + $0x150] sm:$0xff] 0.0
          %304 = vst [vmem:[#allocation2 + $0x158] sm:$0xff] 0.0
          %305 = vst [vmem:[#allocation2 + $0x160] sm:$0xff] 0.0
          %306 = vst [vmem:[#allocation2 + $0x168] sm:$0xff] 0.0
          %307 = vst [vmem:[#allocation2 + $0x170] sm:$0xff] 0.0
          %308 = vst [vmem:[#allocation2 + $0x178] sm:$0xff] 0.0
          %309 = vst [vmem:[#allocation2 + $0x180] sm:$0xff] 0.0
          %310 = vst [vmem:[#allocation2 + $0x188] sm:$0xff] 0.0
          %311 = vst [vmem:[#allocation2 + $0x190] sm:$0xff] 0.0
          %312 = vst [vmem:[#allocation2 + $0x198] sm:$0xff] 0.0
          %313 = vst [vmem:[#allocation2 + $0x1a0] sm:$0xff] 0.0
          %314 = vst [vmem:[#allocation2 + $0x1a8] sm:$0xff] 0.0
          %315 = vst [vmem:[#allocation2 + $0x1b0] sm:$0xff] 0.0
          %316 = vst [vmem:[#allocation2 + $0x1b8] sm:$0xff] 0.0
          %317 = vst [vmem:[#allocation2 + $0x1c0] sm:$0xff] 0.0
          %318 = vst [vmem:[#allocation2 + $0x1c8] sm:$0xff] 0.0
          %319 = vst [vmem:[#allocation2 + $0x1d0] sm:$0xff] 0.0
          %320 = vst [vmem:[#allocation2 + $0x1d8] sm:$0xff] 0.0
          %321 = vst [vmem:[#allocation2 + $0x1e0] sm:$0xff] 0.0
          %322 = vst [vmem:[#allocation2 + $0x1e8] sm:$0xff] 0.0
          %323 = vst [vmem:[#allocation2 + $0x1f0] sm:$0xff] 0.0
          %324 = vst [vmem:[#allocation2 + $0x1f8] sm:$0xff] 0.0
        $region44: #{tpu_custom_call.1} parent=31 // pred_fallthru
          _
        %v325 = vld [vmem:[#allocation2] sm:$0xff]
        %v326 = vld [vmem:[#allocation2 + $0x8] sm:$0xff]
        %v327 = vld [vmem:[#allocation2 + $0x10] sm:$0xff]
        %v328 = vld [vmem:[#allocation2 + $0x18] sm:$0xff]
        %v329 = vld [vmem:[#allocation2 + $0x20] sm:$0xff]
        %v330 = vld [vmem:[#allocation2 + $0x28] sm:$0xff]
        %v331 = vld [vmem:[#allocation2 + $0x30] sm:$0xff]
        %v332 = vld [vmem:[#allocation2 + $0x38] sm:$0xff]
        %v333 = vld [vmem:[#allocation2 + $0x40] sm:$0xff]
        %v334 = vld [vmem:[#allocation2 + $0x48] sm:$0xff]
        %v335 = vld [vmem:[#allocation2 + $0x50] sm:$0xff]
        %v336 = vld [vmem:[#allocation2 + $0x58] sm:$0xff]
        %v337 = vld [vmem:[#allocation2 + $0x60] sm:$0xff]
        %v338 = vld [vmem:[#allocation2 + $0x68] sm:$0xff]
        %v339 = vld [vmem:[#allocation2 + $0x70] sm:$0xff]
        %v340 = vld [vmem:[#allocation2 + $0x78] sm:$0xff]
        %v341 = vld [vmem:[#allocation2 + $0x80] sm:$0xff]
        %v342 = vld [vmem:[#allocation2 + $0x88] sm:$0xff]
        %v343 = vld [vmem:[#allocation2 + $0x90] sm:$0xff]
        %v344 = vld [vmem:[#allocation2 + $0x98] sm:$0xff]
        %v345 = vld [vmem:[#allocation2 + $0xa0] sm:$0xff]
        %v346 = vld [vmem:[#allocation2 + $0xa8] sm:$0xff]
        %v347 = vld [vmem:[#allocation2 + $0xb0] sm:$0xff]
        %v348 = vld [vmem:[#allocation2 + $0xb8] sm:$0xff]
        %v349 = vld [vmem:[#allocation2 + $0xc0] sm:$0xff]
        %v350 = vld [vmem:[#allocation2 + $0xc8] sm:$0xff]
        %v351 = vld [vmem:[#allocation2 + $0xd0] sm:$0xff]
        %v352 = vld [vmem:[#allocation2 + $0xd8] sm:$0xff]
        %v353 = vld [vmem:[#allocation2 + $0xe0] sm:$0xff]
        %v354 = vld [vmem:[#allocation2 + $0xe8] sm:$0xff]
        %v355 = vld [vmem:[#allocation2 + $0xf0] sm:$0xff]
        %v356 = vld [vmem:[#allocation2 + $0xf8] sm:$0xff]
        %v357 = vld [vmem:[#allocation2 + $0x100] sm:$0xff]
        %v358 = vld [vmem:[#allocation2 + $0x108] sm:$0xff]
        %v359 = vld [vmem:[#allocation2 + $0x110] sm:$0xff]
        %v360 = vld [vmem:[#allocation2 + $0x118] sm:$0xff]
        %v361 = vld [vmem:[#allocation2 + $0x120] sm:$0xff]
        %v362 = vld [vmem:[#allocation2 + $0x128] sm:$0xff]
        %v363 = vld [vmem:[#allocation2 + $0x130] sm:$0xff]
        %v364 = vld [vmem:[#allocation2 + $0x138] sm:$0xff]
        %v365 = vld [vmem:[#allocation2 + $0x140] sm:$0xff]
        %v366 = vld [vmem:[#allocation2 + $0x148] sm:$0xff]
        %v367 = vld [vmem:[#allocation2 + $0x150] sm:$0xff]
        %v368 = vld [vmem:[#allocation2 + $0x158] sm:$0xff]
        %v369 = vld [vmem:[#allocation2 + $0x160] sm:$0xff]
        %v370 = vld [vmem:[#allocation2 + $0x168] sm:$0xff]
        %v371 = vld [vmem:[#allocation2 + $0x170] sm:$0xff]
        %v372 = vld [vmem:[#allocation2 + $0x178] sm:$0xff]
        %v373 = vld [vmem:[#allocation2 + $0x180] sm:$0xff]
        %v374 = vld [vmem:[#allocation2 + $0x188] sm:$0xff]
        %v375 = vld [vmem:[#allocation2 + $0x190] sm:$0xff]
        %v376 = vld [vmem:[#allocation2 + $0x198] sm:$0xff]
        %v377 = vld [vmem:[#allocation2 + $0x1a0] sm:$0xff]
        %v378 = vld [vmem:[#allocation2 + $0x1a8] sm:$0xff]
        %v379 = vld [vmem:[#allocation2 + $0x1b0] sm:$0xff]
        %v380 = vld [vmem:[#allocation2 + $0x1b8] sm:$0xff]
        %v381 = vld [vmem:[#allocation2 + $0x1c0] sm:$0xff]
        %v382 = vld [vmem:[#allocation2 + $0x1c8] sm:$0xff]
        %v383 = vld [vmem:[#allocation2 + $0x1d0] sm:$0xff]
        %v384 = vld [vmem:[#allocation2 + $0x1d8] sm:$0xff]
        %v385 = vld [vmem:[#allocation2 + $0x1e0] sm:$0xff]
        %v386 = vld [vmem:[#allocation2 + $0x1e8] sm:$0xff]
        %v387 = vld [vmem:[#allocation2 + $0x1f0] sm:$0xff]
        %v388 = vld [vmem:[#allocation2 + $0x1f8] sm:$0xff]
        %v389 = vld [vmem:[%s220] sm:$0xf]
        %v390 = vld [vmem:[%s220 + $0x4] sm:$0xf]
        %v391 = vld [vmem:[%s220 + $0x8] sm:$0xf]
        %v392 = vld [vmem:[%s220 + $0xc] sm:$0xf]
        %v393 = vld [vmem:[%s220 + $0x10] sm:$0xf]
        %v394 = vld [vmem:[%s220 + $0x14] sm:$0xf]
        %v395 = vld [vmem:[%s220 + $0x18] sm:$0xf]
        %v396 = vld [vmem:[%s220 + $0x1c] sm:$0xf]
        %v397 = vld [vmem:[%s220 + $0x20] sm:$0xf]
        %v398 = vld [vmem:[%s220 + $0x24] sm:$0xf]
        %v399 = vld [vmem:[%s220 + $0x28] sm:$0xf]
        %v400 = vld [vmem:[%s220 + $0x2c] sm:$0xf]
        %v401 = vld [vmem:[%s220 + $0x30] sm:$0xf]
        %v402 = vld [vmem:[%s220 + $0x34] sm:$0xf]
        %v403 = vld [vmem:[%s220 + $0x38] sm:$0xf]
        %v404 = vld [vmem:[%s220 + $0x3c] sm:$0xf]
        %v405 = vld [vmem:[%s220 + $0x40] sm:$0xf]
        %v406 = vld [vmem:[%s220 + $0x44] sm:$0xf]
        %v407 = vld [vmem:[%s220 + $0x48] sm:$0xf]
        %v408 = vld [vmem:[%s220 + $0x4c] sm:$0xf]
        %v409 = vld [vmem:[%s220 + $0x50] sm:$0xf]
        %v410 = vld [vmem:[%s220 + $0x54] sm:$0xf]
        %v411 = vld [vmem:[%s220 + $0x58] sm:$0xf]
        %v412 = vld [vmem:[%s220 + $0x5c] sm:$0xf]
        %v413 = vld [vmem:[%s220 + $0x60] sm:$0xf]
        %v414 = vld [vmem:[%s220 + $0x64] sm:$0xf]
        %v415 = vld [vmem:[%s220 + $0x68] sm:$0xf]
        %v416 = vld [vmem:[%s220 + $0x6c] sm:$0xf]
        %v417 = vld [vmem:[%s220 + $0x70] sm:$0xf]
        %v418 = vld [vmem:[%s220 + $0x74] sm:$0xf]
        %v419 = vld [vmem:[%s220 + $0x78] sm:$0xf]
        %v420 = vld [vmem:[%s220 + $0x7c] sm:$0xf]
        %v421 = vld [vmem:[%s220 + $0x80] sm:$0xf]
        %v422 = vld [vmem:[%s220 + $0x84] sm:$0xf]
        %v423 = vld [vmem:[%s220 + $0x88] sm:$0xf]
        %v424 = vld [vmem:[%s220 + $0x8c] sm:$0xf]
        %v425 = vld [vmem:[%s220 + $0x90] sm:$0xf]
        %v426 = vld [vmem:[%s220 + $0x94] sm:$0xf]
        %v427 = vld [vmem:[%s220 + $0x98] sm:$0xf]
        %v428 = vld [vmem:[%s220 + $0x9c] sm:$0xf]
        %v429 = vld [vmem:[%s220 + $0xa0] sm:$0xf]
        %v430 = vld [vmem:[%s220 + $0xa4] sm:$0xf]
        %v431 = vld [vmem:[%s220 + $0xa8] sm:$0xf]
        %v432 = vld [vmem:[%s220 + $0xac] sm:$0xf]
        %v433 = vld [vmem:[%s220 + $0xb0] sm:$0xf]
        %v434 = vld [vmem:[%s220 + $0xb4] sm:$0xf]
        %v435 = vld [vmem:[%s220 + $0xb8] sm:$0xf]
        %v436 = vld [vmem:[%s220 + $0xbc] sm:$0xf]
        %v437 = vld [vmem:[%s220 + $0xc0] sm:$0xf]
        %v438 = vld [vmem:[%s220 + $0xc4] sm:$0xf]
        %v439 = vld [vmem:[%s220 + $0xc8] sm:$0xf]
        %v440 = vld [vmem:[%s220 + $0xcc] sm:$0xf]
        %v441 = vld [vmem:[%s220 + $0xd0] sm:$0xf]
        %v442 = vld [vmem:[%s220 + $0xd4] sm:$0xf]
        %v443 = vld [vmem:[%s220 + $0xd8] sm:$0xf]
        %v444 = vld [vmem:[%s220 + $0xdc] sm:$0xf]
        %v445 = vld [vmem:[%s220 + $0xe0] sm:$0xf]
        %v446 = vld [vmem:[%s220 + $0xe4] sm:$0xf]
        %v447 = vld [vmem:[%s220 + $0xe8] sm:$0xf]
        %v448 = vld [vmem:[%s220 + $0xec] sm:$0xf]
        %v449 = vld [vmem:[%s220 + $0xf0] sm:$0xf]
        %v450 = vld [vmem:[%s220 + $0xf4] sm:$0xf]
        %v451 = vld [vmem:[%s220 + $0xf8] sm:$0xf]
        %v452 = vld [vmem:[%s220 + $0xfc] sm:$0xf]
        %v453 = vld [vmem:[#allocation6] sm:$0xf]
        %v454 = vld [vmem:[#allocation6 + $0x4] sm:$0xf]
        %v455 = vld [vmem:[#allocation6 + $0x8] sm:$0xf]
        %v456 = vld [vmem:[#allocation6 + $0xc] sm:$0xf]
        %v457 = vld [vmem:[#allocation6 + $0x10] sm:$0xf]
        %v458 = vld [vmem:[#allocation6 + $0x14] sm:$0xf]
        %v459 = vld [vmem:[#allocation6 + $0x18] sm:$0xf]
        %v460 = vld [vmem:[#allocation6 + $0x1c] sm:$0xf]
        %v461 = vld [vmem:[#allocation6 + $0x20] sm:$0xf]
        %v462 = vld [vmem:[#allocation6 + $0x24] sm:$0xf]
        %v463 = vld [vmem:[#allocation6 + $0x28] sm:$0xf]
        %v464 = vld [vmem:[#allocation6 + $0x2c] sm:$0xf]
        %v465 = vld [vmem:[#allocation6 + $0x30] sm:$0xf]
        %v466 = vld [vmem:[#allocation6 + $0x34] sm:$0xf]
        %v467 = vld [vmem:[#allocation6 + $0x38] sm:$0xf]
        %v468 = vld [vmem:[#allocation6 + $0x3c] sm:$0xf]
        %v533 = vunpack.c.l.b16 %v389
        %v534 = vunpack.c.l.b16 %v390
        %v535 = vunpack.c.l.b16 %v391
        %v536 = vunpack.c.l.b16 %v392
        %v537 = vunpack.c.l.b16 %v393
        %v538 = vunpack.c.l.b16 %v394
        %v539 = vunpack.c.l.b16 %v395
        %v540 = vunpack.c.l.b16 %v396
        %v541 = vunpack.c.l.b16 %v397
        %v542 = vunpack.c.l.b16 %v398
        %v543 = vunpack.c.l.b16 %v399
        %v544 = vunpack.c.l.b16 %v400
        %v545 = vunpack.c.l.b16 %v401
        %v546 = vunpack.c.l.b16 %v402
        %v547 = vunpack.c.l.b16 %v403
        %v548 = vunpack.c.l.b16 %v404
        %v549 = vunpack.c.l.b16 %v405
        %v550 = vunpack.c.l.b16 %v406
        %v551 = vunpack.c.l.b16 %v407
        %v552 = vunpack.c.l.b16 %v408
        %v553 = vunpack.c.l.b16 %v409
        %v554 = vunpack.c.l.b16 %v410
        %v555 = vunpack.c.l.b16 %v411
        %v556 = vunpack.c.l.b16 %v412
        %v557 = vunpack.c.l.b16 %v413
        %v558 = vunpack.c.l.b16 %v414
        %v559 = vunpack.c.l.b16 %v415
        %v560 = vunpack.c.l.b16 %v416
        %v561 = vunpack.c.l.b16 %v417
        %v562 = vunpack.c.l.b16 %v418
        %v563 = vunpack.c.l.b16 %v419
        %v564 = vunpack.c.l.b16 %v420
        %v565 = vunpack.c.l.b16 %v421
        %v566 = vunpack.c.l.b16 %v422
        %v567 = vunpack.c.l.b16 %v423
        %v568 = vunpack.c.l.b16 %v424
        %v569 = vunpack.c.l.b16 %v425
        %v570 = vunpack.c.l.b16 %v426
        %v571 = vunpack.c.l.b16 %v427
        %v572 = vunpack.c.l.b16 %v428
        %v573 = vunpack.c.l.b16 %v429
        %v574 = vunpack.c.l.b16 %v430
        %v575 = vunpack.c.l.b16 %v431
        %v576 = vunpack.c.l.b16 %v432
        %v577 = vunpack.c.l.b16 %v433
        %v578 = vunpack.c.l.b16 %v434
        %v579 = vunpack.c.l.b16 %v435
        %v580 = vunpack.c.l.b16 %v436
        %v581 = vunpack.c.l.b16 %v437
        %v582 = vunpack.c.l.b16 %v438
        %v583 = vunpack.c.l.b16 %v439
        %v584 = vunpack.c.l.b16 %v440
        %v585 = vunpack.c.l.b16 %v441
        %v586 = vunpack.c.l.b16 %v442
        %v587 = vunpack.c.l.b16 %v443
        %v588 = vunpack.c.l.b16 %v444
        %v589 = vunpack.c.l.b16 %v445
        %v590 = vunpack.c.l.b16 %v446
        %v591 = vunpack.c.l.b16 %v447
        %v592 = vunpack.c.l.b16 %v448
        %v593 = vunpack.c.l.b16 %v449
        %v594 = vunpack.c.l.b16 %v450
        %v595 = vunpack.c.l.b16 %v451
        %v596 = vunpack.c.l.b16 %v452
        %v597 = vpack.c.b16 %v534, %v533
        %v598 = vpack.c.b16 %v536, %v535
        %v599 = vpack.c.b16 %v538, %v537
        %v600 = vpack.c.b16 %v540, %v539
        %v601 = vpack.c.b16 %v542, %v541
        %v602 = vpack.c.b16 %v544, %v543
        %v603 = vpack.c.b16 %v546, %v545
        %v604 = vpack.c.b16 %v548, %v547
        %v605 = vpack.c.b16 %v550, %v549
        %v606 = vpack.c.b16 %v552, %v551
        %v607 = vpack.c.b16 %v554, %v553
        %v608 = vpack.c.b16 %v556, %v555
        %v609 = vpack.c.b16 %v558, %v557
        %v610 = vpack.c.b16 %v560, %v559
        %v611 = vpack.c.b16 %v562, %v561
        %v612 = vpack.c.b16 %v564, %v563
        %v613 = vpack.c.b16 %v566, %v565
        %v614 = vpack.c.b16 %v568, %v567
        %v615 = vpack.c.b16 %v570, %v569
        %v616 = vpack.c.b16 %v572, %v571
        %v617 = vpack.c.b16 %v574, %v573
        %v618 = vpack.c.b16 %v576, %v575
        %v619 = vpack.c.b16 %v578, %v577
        %v620 = vpack.c.b16 %v580, %v579
        %v621 = vpack.c.b16 %v582, %v581
        %v622 = vpack.c.b16 %v584, %v583
        %v623 = vpack.c.b16 %v586, %v585
        %v624 = vpack.c.b16 %v588, %v587
        %v625 = vpack.c.b16 %v590, %v589
        %v626 = vpack.c.b16 %v592, %v591
        %v627 = vpack.c.b16 %v594, %v593
        %v628 = vpack.c.b16 %v596, %v595
        %v677 = vunpack.c.l.b16 %v453
        %v678 = vunpack.c.l.b16 %v454
        %v679 = vunpack.c.l.b16 %v455
        %v680 = vunpack.c.l.b16 %v456
        %v681 = vunpack.c.l.b16 %v457
        %v682 = vunpack.c.l.b16 %v458
        %v683 = vunpack.c.l.b16 %v459
        %v684 = vunpack.c.l.b16 %v460
        %v685 = vunpack.c.l.b16 %v461
        %v686 = vunpack.c.l.b16 %v462
        %v687 = vunpack.c.l.b16 %v463
        %v688 = vunpack.c.l.b16 %v464
        %v689 = vunpack.c.l.b16 %v465
        %v690 = vunpack.c.l.b16 %v466
        %v691 = vunpack.c.l.b16 %v467
        %v692 = vunpack.c.l.b16 %v468
        %v693 = vpack.c.b16 %v678, %v677
        %v694 = vpack.c.b16 %v680, %v679
        %v695 = vpack.c.b16 %v682, %v681
        %v696 = vpack.c.b16 %v684, %v683
        %v697 = vpack.c.b16 %v686, %v685
        %v698 = vpack.c.b16 %v688, %v687
        %v699 = vpack.c.b16 %v690, %v689
        %v700 = vpack.c.b16 %v692, %v691
        %709 = vmatprep.subr.bf16.mxu0 0
        %710 = vmatpush1.bf16.msra.mxu0 %v693
        %711 = vmatprep.subr.bf16.mxu0 0
        %712 = vmatpush1.bf16.msra.mxu0 %v694
        %713 = vmatprep.subr.bf16.mxu0 0
        %714 = vmatpush1.bf16.msra.mxu0 %v695
        %715 = vmatprep.subr.bf16.mxu0 0
        %716 = vmatpush1.bf16.msra.mxu0 %v696
        %717 = vmatprep.subr.bf16.mxu0 0
        %718 = vmatpush1.bf16.msra.mxu0 %v697
        %719 = vmatprep.subr.bf16.mxu0 0
        %720 = vmatpush1.bf16.msra.mxu0 %v698
        %721 = vmatprep.subr.bf16.mxu0 0
        %722 = vmatpush1.bf16.msra.mxu0 %v699
        %723 = vmatprep.subr.bf16.mxu0 0
        %724 = vmatpush1.bf16.msra.mxu0 %v700
        %725 = vmatprep.subr.bf16.mxu0 0
        %726 = vmatpush1.bf16.msra.mxu0 0
        %727 = vmatprep.subr.bf16.mxu0 0
        %728 = vmatpush1.bf16.msra.mxu0 0
        %729 = vmatprep.subr.bf16.mxu0 0
        %730 = vmatpush1.bf16.msra.mxu0 0
        %731 = vmatprep.subr.bf16.mxu0 0
        %732 = vmatpush1.bf16.msra.mxu0 0
        %733 = vmatprep.subr.bf16.mxu0 0
        %734 = vmatpush1.bf16.msra.mxu0 0
        %735 = vmatprep.subr.bf16.mxu0 0
        %736 = vmatpush1.bf16.msra.mxu0 0
        %737 = vmatprep.subr.bf16.mxu0 0
        %738 = vmatpush1.bf16.msra.mxu0 0
        %739 = vmatprep.subr.bf16.mxu0 0
        %740 = vmatpush1.bf16.msra.mxu0 0
        %741 = vmatprep.mubr.bf16.mxu0 0
        %742 = vmatmul.mubr.bf16.gmra.mrb[0].mxu0 %v597
        %v743 = vpop.f32.mrb[0].mxu0
        %v744 = vadd.f32 0.0, %v743
        %v745 = vpop.f32.mrb[0].mxu0
        %v746 = vpop.f32.mrb[0].mxu0
        %v747 = vadd.f32 0.0, %v746
        %v748 = vpop.f32.mrb[0].mxu0
        %749 = vmatprep.mubr.bf16.mxu0 0
        %750 = vmatmul.mubr.bf16.gmra.mrb[0].mxu0 %v598
        %v751 = vpop.f32.mrb[0].mxu0
        %v752 = vadd.f32 0.0, %v751
        %v753 = vpop.f32.mrb[0].mxu0
        %v754 = vpop.f32.mrb[0].mxu0
        %v755 = vadd.f32 0.0, %v754
        %v756 = vpop.f32.mrb[0].mxu0
        %757 = vmatprep.mubr.bf16.mxu0 0
        %758 = vmatmul.mubr.bf16.gmra.mrb[0].mxu0 %v599
        %v759 = vpop.f32.mrb[0].mxu0
        %v760 = vadd.f32 0.0, %v759
        %v761 = vpop.f32.mrb[0].mxu0
        %v762 = vpop.f32.mrb[0].mxu0
        %v763 = vadd.f32 0.0, %v762
        %v764 = vpop.f32.mrb[0].mxu0
        %765 = vmatprep.mubr.bf16.mxu0 0
        %766 = vmatmul.mubr.bf16.gmra.mrb[0].mxu0 %v600
        %v767 = vpop.f32.mrb[0].mxu0
        %v768 = vadd.f32 0.0, %v767
        %v769 = vpop.f32.mrb[0].mxu0
        %v770 = vpop.f32.mrb[0].mxu0
        %v771 = vadd.f32 0.0, %v770
        %v772 = vpop.f32.mrb[0].mxu0
        %773 = vmatprep.mubr.bf16.mxu0 0
        %774 = vmatmul.mubr.bf16.gmra.mrb[0].mxu0 %v601
        %v775 = vpop.f32.mrb[0].mxu0
        %v776 = vadd.f32 0.0, %v775
        %v777 = vpop.f32.mrb[0].mxu0
        %v778 = vpop.f32.mrb[0].mxu0
        %v779 = vadd.f32 0.0, %v778
        %v780 = vpop.f32.mrb[0].mxu0
        %781 = vmatprep.mubr.bf16.mxu0 0
        %782 = vmatmul.mubr.bf16.gmra.mrb[0].mxu0 %v602
        %v783 = vpop.f32.mrb[0].mxu0
        %v784 = vadd.f32 0.0, %v783
        %v785 = vpop.f32.mrb[0].mxu0
        %v786 = vpop.f32.mrb[0].mxu0
        %v787 = vadd.f32 0.0, %v786
        %v788 = vpop.f32.mrb[0].mxu0
        %789 = vmatprep.mubr.bf16.mxu0 0
        %790 = vmatmul.mubr.bf16.gmra.mrb[0].mxu0 %v603
        %v791 = vpop.f32.mrb[0].mxu0
        %v792 = vadd.f32 0.0, %v791
        %v793 = vpop.f32.mrb[0].mxu0
        %v794 = vpop.f32.mrb[0].mxu0
        %v795 = vadd.f32 0.0, %v794
        %v796 = vpop.f32.mrb[0].mxu0
        %797 = vmatprep.mubr.bf16.mxu0 0
        %798 = vmatmul.mubr.bf16.gmra.mrb[0].mxu0 %v604
        %v799 = vpop.f32.mrb[0].mxu0
        %v800 = vadd.f32 0.0, %v799
        %v801 = vpop.f32.mrb[0].mxu0
        %v802 = vpop.f32.mrb[0].mxu0
        %v803 = vadd.f32 0.0, %v802
        %v804 = vpop.f32.mrb[0].mxu0
        %805 = vmatprep.mubr.bf16.mxu0 0
        %806 = vmatmul.mubr.bf16.gmra.mrb[0].mxu0 %v605
        %v807 = vpop.f32.mrb[0].mxu0
        %v808 = vadd.f32 0.0, %v807
        %v809 = vpop.f32.mrb[0].mxu0
        %v810 = vpop.f32.mrb[0].mxu0
        %v811 = vadd.f32 0.0, %v810
        %v812 = vpop.f32.mrb[0].mxu0
        %813 = vmatprep.mubr.bf16.mxu0 0
        %814 = vmatmul.mubr.bf16.gmra.mrb[0].mxu0 %v606
        %v815 = vpop.f32.mrb[0].mxu0
        %v816 = vadd.f32 0.0, %v815
        %v817 = vpop.f32.mrb[0].mxu0
        %v818 = vpop.f32.mrb[0].mxu0
        %v819 = vadd.f32 0.0, %v818
        %v820 = vpop.f32.mrb[0].mxu0
        %821 = vmatprep.mubr.bf16.mxu0 0
        %822 = vmatmul.mubr.bf16.gmra.mrb[0].mxu0 %v607
        %v823 = vpop.f32.mrb[0].mxu0
        %v824 = vadd.f32 0.0, %v823
        %v825 = vpop.f32.mrb[0].mxu0
        %v826 = vpop.f32.mrb[0].mxu0
        %v827 = vadd.f32 0.0, %v826
        %v828 = vpop.f32.mrb[0].mxu0
        %829 = vmatprep.mubr.bf16.mxu0 0
        %830 = vmatmul.mubr.bf16.gmra.mrb[0].mxu0 %v608
        %v831 = vpop.f32.mrb[0].mxu0
        %v832 = vadd.f32 0.0, %v831
        %v833 = vpop.f32.mrb[0].mxu0
        %v834 = vpop.f32.mrb[0].mxu0
        %v835 = vadd.f32 0.0, %v834
        %v836 = vpop.f32.mrb[0].mxu0
        %837 = vmatprep.mubr.bf16.mxu0 0
        %838 = vmatmul.mubr.bf16.gmra.mrb[0].mxu0 %v609
        %v839 = vpop.f32.mrb[0].mxu0
        %v840 = vadd.f32 0.0, %v839
        %v841 = vpop.f32.mrb[0].mxu0
        %v842 = vpop.f32.mrb[0].mxu0
        %v843 = vadd.f32 0.0, %v842
        %v844 = vpop.f32.mrb[0].mxu0
        %845 = vmatprep.mubr.bf16.mxu0 0
        %846 = vmatmul.mubr.bf16.gmra.mrb[0].mxu0 %v610
        %v847 = vpop.f32.mrb[0].mxu0
        %v848 = vadd.f32 0.0, %v847
        %v849 = vpop.f32.mrb[0].mxu0
        %v850 = vpop.f32.mrb[0].mxu0
        %v851 = vadd.f32 0.0, %v850
        %v852 = vpop.f32.mrb[0].mxu0
        %853 = vmatprep.mubr.bf16.mxu0 0
        %854 = vmatmul.mubr.bf16.gmra.mrb[0].mxu0 %v611
        %v855 = vpop.f32.mrb[0].mxu0
        %v856 = vadd.f32 0.0, %v855
        %v857 = vpop.f32.mrb[0].mxu0
        %v858 = vpop.f32.mrb[0].mxu0
        %v859 = vadd.f32 0.0, %v858
        %v860 = vpop.f32.mrb[0].mxu0
        %861 = vmatprep.mubr.bf16.mxu0 0
        %862 = vmatmul.mubr.bf16.gmra.mrb[0].mxu0 %v612
        %v863 = vpop.f32.mrb[0].mxu0
        %v864 = vadd.f32 0.0, %v863
        %v865 = vpop.f32.mrb[0].mxu0
        %v866 = vpop.f32.mrb[0].mxu0
        %v867 = vadd.f32 0.0, %v866
        %v868 = vpop.f32.mrb[0].mxu0
        %869 = vmatprep.mubr.bf16.mxu0 0
        %870 = vmatmul.mubr.bf16.gmra.mrb[0].mxu0 %v613
        %v871 = vpop.f32.mrb[0].mxu0
        %v872 = vadd.f32 0.0, %v871
        %v873 = vpop.f32.mrb[0].mxu0
        %v874 = vpop.f32.mrb[0].mxu0
        %v875 = vadd.f32 0.0, %v874
        %v876 = vpop.f32.mrb[0].mxu0
        %877 = vmatprep.mubr.bf16.mxu0 0
        %878 = vmatmul.mubr.bf16.gmra.mrb[0].mxu0 %v614
        %v879 = vpop.f32.mrb[0].mxu0
        %v880 = vadd.f32 0.0, %v879
        %v881 = vpop.f32.mrb[0].mxu0
        %v882 = vpop.f32.mrb[0].mxu0
        %v883 = vadd.f32 0.0, %v882
        %v884 = vpop.f32.mrb[0].mxu0
        %885 = vmatprep.mubr.bf16.mxu0 0
        %886 = vmatmul.mubr.bf16.gmra.mrb[0].mxu0 %v615
        %v887 = vpop.f32.mrb[0].mxu0
        %v888 = vadd.f32 0.0, %v887
        %v889 = vpop.f32.mrb[0].mxu0
        %v890 = vpop.f32.mrb[0].mxu0
        %v891 = vadd.f32 0.0, %v890
        %v892 = vpop.f32.mrb[0].mxu0
        %893 = vmatprep.mubr.bf16.mxu0 0
        %894 = vmatmul.mubr.bf16.gmra.mrb[0].mxu0 %v616
        %v895 = vpop.f32.mrb[0].mxu0
        %v896 = vadd.f32 0.0, %v895
        %v897 = vpop.f32.mrb[0].mxu0
        %v898 = vpop.f32.mrb[0].mxu0
        %v899 = vadd.f32 0.0, %v898
        %v900 = vpop.f32.mrb[0].mxu0
        %901 = vmatprep.mubr.bf16.mxu0 0
        %902 = vmatmul.mubr.bf16.gmra.mrb[0].mxu0 %v617
        %v903 = vpop.f32.mrb[0].mxu0
        %v904 = vadd.f32 0.0, %v903
        %v905 = vpop.f32.mrb[0].mxu0
        %v906 = vpop.f32.mrb[0].mxu0
        %v907 = vadd.f32 0.0, %v906
        %v908 = vpop.f32.mrb[0].mxu0
        %909 = vmatprep.mubr.bf16.mxu0 0
        %910 = vmatmul.mubr.bf16.gmra.mrb[0].mxu0 %v618
        %v911 = vpop.f32.mrb[0].mxu0
        %v912 = vadd.f32 0.0, %v911
        %v913 = vpop.f32.mrb[0].mxu0
        %v914 = vpop.f32.mrb[0].mxu0
        %v915 = vadd.f32 0.0, %v914
        %v916 = vpop.f32.mrb[0].mxu0
        %917 = vmatprep.mubr.bf16.mxu0 0
        %918 = vmatmul.mubr.bf16.gmra.mrb[0].mxu0 %v619
        %v919 = vpop.f32.mrb[0].mxu0
        %v920 = vadd.f32 0.0, %v919
        %v921 = vpop.f32.mrb[0].mxu0
        %v922 = vpop.f32.mrb[0].mxu0
        %v923 = vadd.f32 0.0, %v922
        %v924 = vpop.f32.mrb[0].mxu0
        %925 = vmatprep.mubr.bf16.mxu0 0
        %926 = vmatmul.mubr.bf16.gmra.mrb[0].mxu0 %v620
        %v927 = vpop.f32.mrb[0].mxu0
        %v928 = vadd.f32 0.0, %v927
        %v929 = vpop.f32.mrb[0].mxu0
        %v930 = vpop.f32.mrb[0].mxu0
        %v931 = vadd.f32 0.0, %v930
        %v932 = vpop.f32.mrb[0].mxu0
        %933 = vmatprep.mubr.bf16.mxu0 0
        %934 = vmatmul.mubr.bf16.gmra.mrb[0].mxu0 %v621
        %v935 = vpop.f32.mrb[0].mxu0
        %v936 = vadd.f32 0.0, %v935
        %v937 = vpop.f32.mrb[0].mxu0
        %v938 = vpop.f32.mrb[0].mxu0
        %v939 = vadd.f32 0.0, %v938
        %v940 = vpop.f32.mrb[0].mxu0
        %941 = vmatprep.mubr.bf16.mxu0 0
        %942 = vmatmul.mubr.bf16.gmra.mrb[0].mxu0 %v622
        %v943 = vpop.f32.mrb[0].mxu0
        %v944 = vadd.f32 0.0, %v943
        %v945 = vpop.f32.mrb[0].mxu0
        %v946 = vpop.f32.mrb[0].mxu0
        %v947 = vadd.f32 0.0, %v946
        %v948 = vpop.f32.mrb[0].mxu0
        %949 = vmatprep.mubr.bf16.mxu0 0
        %950 = vmatmul.mubr.bf16.gmra.mrb[0].mxu0 %v623
        %v951 = vpop.f32.mrb[0].mxu0
        %v952 = vadd.f32 0.0, %v951
        %v953 = vpop.f32.mrb[0].mxu0
        %v954 = vpop.f32.mrb[0].mxu0
        %v955 = vadd.f32 0.0, %v954
        %v956 = vpop.f32.mrb[0].mxu0
        %957 = vmatprep.mubr.bf16.mxu0 0
        %958 = vmatmul.mubr.bf16.gmra.mrb[0].mxu0 %v624
        %v959 = vpop.f32.mrb[0].mxu0
        %v960 = vadd.f32 0.0, %v959
        %v961 = vpop.f32.mrb[0].mxu0
        %v962 = vpop.f32.mrb[0].mxu0
        %v963 = vadd.f32 0.0, %v962
        %v964 = vpop.f32.mrb[0].mxu0
        %965 = vmatprep.mubr.bf16.mxu0 0
        %966 = vmatmul.mubr.bf16.gmra.mrb[0].mxu0 %v625
        %v967 = vpop.f32.mrb[0].mxu0
        %v968 = vadd.f32 0.0, %v967
        %v969 = vpop.f32.mrb[0].mxu0
        %v970 = vpop.f32.mrb[0].mxu0
        %v971 = vadd.f32 0.0, %v970
        %v972 = vpop.f32.mrb[0].mxu0
        %973 = vmatprep.mubr.bf16.mxu0 0
        %974 = vmatmul.mubr.bf16.gmra.mrb[0].mxu0 %v626
        %v975 = vpop.f32.mrb[0].mxu0
        %v976 = vadd.f32 0.0, %v975
        %v977 = vpop.f32.mrb[0].mxu0
        %v978 = vpop.f32.mrb[0].mxu0
        %v979 = vadd.f32 0.0, %v978
        %v980 = vpop.f32.mrb[0].mxu0
        %981 = vmatprep.mubr.bf16.mxu0 0
        %982 = vmatmul.mubr.bf16.gmra.mrb[0].mxu0 %v627
        %v983 = vpop.f32.mrb[0].mxu0
        %v984 = vadd.f32 0.0, %v983
        %v985 = vpop.f32.mrb[0].mxu0
        %v986 = vpop.f32.mrb[0].mxu0
        %v987 = vadd.f32 0.0, %v986
        %v988 = vpop.f32.mrb[0].mxu0
        %989 = vmatprep.mubr.bf16.mxu0 0
        %990 = vmatmul.mubr.bf16.gmra.mrb[0].mxu0 %v628
        %v991 = vpop.f32.mrb[0].mxu0
        %v992 = vadd.f32 0.0, %v991
        %v993 = vpop.f32.mrb[0].mxu0
        %v994 = vpop.f32.mrb[0].mxu0
        %v995 = vadd.f32 0.0, %v994
        %v996 = vpop.f32.mrb[0].mxu0
        %997 = vdwg.mxu0
        %v998 = vadd.f32 %v325, %v744
        %v999 = vadd.f32 %v326, %v747
        %v1000 = vadd.f32 %v327, %v752
        %v1001 = vadd.f32 %v328, %v755
        %v1002 = vadd.f32 %v329, %v760
        %v1003 = vadd.f32 %v330, %v763
        %v1004 = vadd.f32 %v331, %v768
        %v1005 = vadd.f32 %v332, %v771
        %v1006 = vadd.f32 %v333, %v776
        %v1007 = vadd.f32 %v334, %v779
        %v1008 = vadd.f32 %v335, %v784
        %v1009 = vadd.f32 %v336, %v787
        %v1010 = vadd.f32 %v337, %v792
        %v1011 = vadd.f32 %v338, %v795
        %v1012 = vadd.f32 %v339, %v800
        %v1013 = vadd.f32 %v340, %v803
        %v1014 = vadd.f32 %v341, %v808
        %v1015 = vadd.f32 %v342, %v811
        %v1016 = vadd.f32 %v343, %v816
        %v1017 = vadd.f32 %v344, %v819
        %v1018 = vadd.f32 %v345, %v824
        %v1019 = vadd.f32 %v346, %v827
        %v1020 = vadd.f32 %v347, %v832
        %v1021 = vadd.f32 %v348, %v835
        %v1022 = vadd.f32 %v349, %v840
        %v1023 = vadd.f32 %v350, %v843
        %v1024 = vadd.f32 %v351, %v848
        %v1025 = vadd.f32 %v352, %v851
        %v1026 = vadd.f32 %v353, %v856
        %v1027 = vadd.f32 %v354, %v859
        %v1028 = vadd.f32 %v355, %v864
        %v1029 = vadd.f32 %v356, %v867
        %v1030 = vadd.f32 %v357, %v872
        %v1031 = vadd.f32 %v358, %v875
        %v1032 = vadd.f32 %v359, %v880
        %v1033 = vadd.f32 %v360, %v883
        %v1034 = vadd.f32 %v361, %v888
        %v1035 = vadd.f32 %v362, %v891
        %v1036 = vadd.f32 %v363, %v896
        %v1037 = vadd.f32 %v364, %v899
        %v1038 = vadd.f32 %v365, %v904
        %v1039 = vadd.f32 %v366, %v907
        %v1040 = vadd.f32 %v367, %v912
        %v1041 = vadd.f32 %v368, %v915
        %v1042 = vadd.f32 %v369, %v920
        %v1043 = vadd.f32 %v370, %v923
        %v1044 = vadd.f32 %v371, %v928
        %v1045 = vadd.f32 %v372, %v931
        %v1046 = vadd.f32 %v373, %v936
        %v1047 = vadd.f32 %v374, %v939
        %v1048 = vadd.f32 %v375, %v944
        %v1049 = vadd.f32 %v376, %v947
        %v1050 = vadd.f32 %v377, %v952
        %v1051 = vadd.f32 %v378, %v955
        %v1052 = vadd.f32 %v379, %v960
        %v1053 = vadd.f32 %v380, %v963
        %v1054 = vadd.f32 %v381, %v968
        %v1055 = vadd.f32 %v382, %v971
        %v1056 = vadd.f32 %v383, %v976
        %v1057 = vadd.f32 %v384, %v979
        %v1058 = vadd.f32 %v385, %v984
        %v1059 = vadd.f32 %v386, %v987
        %v1060 = vadd.f32 %v387, %v992
        %v1061 = vadd.f32 %v388, %v995
        %1062 = vst [vmem:[#allocation2] sm:$0xff] %v998
        %1063 = vst [vmem:[#allocation2 + $0x8] sm:$0xff] %v999
        %1064 = vst [vmem:[#allocation2 + $0x10] sm:$0xff] %v1000
        %1065 = vst [vmem:[#allocation2 + $0x18] sm:$0xff] %v1001
        %1066 = vst [vmem:[#allocation2 + $0x20] sm:$0xff] %v1002
        %1067 = vst [vmem:[#allocation2 + $0x28] sm:$0xff] %v1003
        %1068 = vst [vmem:[#allocation2 + $0x30] sm:$0xff] %v1004
        %1069 = vst [vmem:[#allocation2 + $0x38] sm:$0xff] %v1005
        %1070 = vst [vmem:[#allocation2 + $0x40] sm:$0xff] %v1006
        %1071 = vst [vmem:[#allocation2 + $0x48] sm:$0xff] %v1007
        %1072 = vst [vmem:[#allocation2 + $0x50] sm:$0xff] %v1008
        %1073 = vst [vmem:[#allocation2 + $0x58] sm:$0xff] %v1009
        %1074 = vst [vmem:[#allocation2 + $0x60] sm:$0xff] %v1010
        %1075 = vst [vmem:[#allocation2 + $0x68] sm:$0xff] %v1011
        %1076 = vst [vmem:[#allocation2 + $0x70] sm:$0xff] %v1012
        %1077 = vst [vmem:[#allocation2 + $0x78] sm:$0xff] %v1013
        %1078 = vst [vmem:[#allocation2 + $0x80] sm:$0xff] %v1014
        %1079 = vst [vmem:[#allocation2 + $0x88] sm:$0xff] %v1015
        %1080 = vst [vmem:[#allocation2 + $0x90] sm:$0xff] %v1016
        %1081 = vst [vmem:[#allocation2 + $0x98] sm:$0xff] %v1017
        %1082 = vst [vmem:[#allocation2 + $0xa0] sm:$0xff] %v1018
        %1083 = vst [vmem:[#allocation2 + $0xa8] sm:$0xff] %v1019
        %1084 = vst [vmem:[#allocation2 + $0xb0] sm:$0xff] %v1020
        %1085 = vst [vmem:[#allocation2 + $0xb8] sm:$0xff] %v1021
        %1086 = vst [vmem:[#allocation2 + $0xc0] sm:$0xff] %v1022
        %1087 = vst [vmem:[#allocation2 + $0xc8] sm:$0xff] %v1023
        %1088 = vst [vmem:[#allocation2 + $0xd0] sm:$0xff] %v1024
        %1089 = vst [vmem:[#allocation2 + $0xd8] sm:$0xff] %v1025
        %1090 = vst [vmem:[#allocation2 + $0xe0] sm:$0xff] %v1026
        %1091 = vst [vmem:[#allocation2 + $0xe8] sm:$0xff] %v1027
        %1092 = vst [vmem:[#allocation2 + $0xf0] sm:$0xff] %v1028
        %1093 = vst [vmem:[#allocation2 + $0xf8] sm:$0xff] %v1029
        %1094 = vst [vmem:[#allocation2 + $0x100] sm:$0xff] %v1030
        %1095 = vst [vmem:[#allocation2 + $0x108] sm:$0xff] %v1031
        %1096 = vst [vmem:[#allocation2 + $0x110] sm:$0xff] %v1032
        %1097 = vst [vmem:[#allocation2 + $0x118] sm:$0xff] %v1033
        %1098 = vst [vmem:[#allocation2 + $0x120] sm:$0xff] %v1034
        %1099 = vst [vmem:[#allocation2 + $0x128] sm:$0xff] %v1035
        %1100 = vst [vmem:[#allocation2 + $0x130] sm:$0xff] %v1036
        %1101 = vst [vmem:[#allocation2 + $0x138] sm:$0xff] %v1037
        %1102 = vst [vmem:[#allocation2 + $0x140] sm:$0xff] %v1038
        %1103 = vst [vmem:[#allocation2 + $0x148] sm:$0xff] %v1039
        %1104 = vst [vmem:[#allocation2 + $0x150] sm:$0xff] %v1040
        %1105 = vst [vmem:[#allocation2 + $0x158] sm:$0xff] %v1041
        %1106 = vst [vmem:[#allocation2 + $0x160] sm:$0xff] %v1042
        %1107 = vst [vmem:[#allocation2 + $0x168] sm:$0xff] %v1043
        %1108 = vst [vmem:[#allocation2 + $0x170] sm:$0xff] %v1044
        %1109 = vst [vmem:[#allocation2 + $0x178] sm:$0xff] %v1045
        %1110 = vst [vmem:[#allocation2 + $0x180] sm:$0xff] %v1046
        %1111 = vst [vmem:[#allocation2 + $0x188] sm:$0xff] %v1047
        %1112 = vst [vmem:[#allocation2 + $0x190] sm:$0xff] %v1048
        %1113 = vst [vmem:[#allocation2 + $0x198] sm:$0xff] %v1049
        %1114 = vst [vmem:[#allocation2 + $0x1a0] sm:$0xff] %v1050
        %1115 = vst [vmem:[#allocation2 + $0x1a8] sm:$0xff] %v1051
        %1116 = vst [vmem:[#allocation2 + $0x1b0] sm:$0xff] %v1052
        %1117 = vst [vmem:[#allocation2 + $0x1b8] sm:$0xff] %v1053
        %1118 = vst [vmem:[#allocation2 + $0x1c0] sm:$0xff] %v1054
        %1119 = vst [vmem:[#allocation2 + $0x1c8] sm:$0xff] %v1055
        %1120 = vst [vmem:[#allocation2 + $0x1d0] sm:$0xff] %v1056
        %1121 = vst [vmem:[#allocation2 + $0x1d8] sm:$0xff] %v1057
        %1122 = vst [vmem:[#allocation2 + $0x1e0] sm:$0xff] %v1058
        %1123 = vst [vmem:[#allocation2 + $0x1e8] sm:$0xff] %v1059
        %1124 = vst [vmem:[#allocation2 + $0x1f0] sm:$0xff] %v1060
        %1125 = vst [vmem:[#allocation2 + $0x1f8] sm:$0xff] %v1061
        // Predicated region
        $region45: #{tpu_custom_call.1} parent=31 // pred_check
          %p1126 = pneg %p257
        $region46: #{tpu_custom_call.1} parent=31 // pred_check_branch
          %1128 = sbr.rel (%p1126) target = $region48
        $region47: #{tpu_custom_call.1} parent=31 // pred_region
          %v1129 = vld [vmem:[#allocation2] sm:$0xff]
          %v1130 = vld [vmem:[#allocation2 + $0x8] sm:$0xff]
          %v1131 = vld [vmem:[#allocation2 + $0x10] sm:$0xff]
          %v1132 = vld [vmem:[#allocation2 + $0x18] sm:$0xff]
          %v1133 = vld [vmem:[#allocation2 + $0x20] sm:$0xff]
          %v1134 = vld [vmem:[#allocation2 + $0x28] sm:$0xff]
          %v1135 = vld [vmem:[#allocation2 + $0x30] sm:$0xff]
          %v1136 = vld [vmem:[#allocation2 + $0x38] sm:$0xff]
          %v1137 = vld [vmem:[#allocation2 + $0x40] sm:$0xff]
          %v1138 = vld [vmem:[#allocation2 + $0x48] sm:$0xff]
          %v1139 = vld [vmem:[#allocation2 + $0x50] sm:$0xff]
          %v1140 = vld [vmem:[#allocation2 + $0x58] sm:$0xff]
          %v1141 = vld [vmem:[#allocation2 + $0x60] sm:$0xff]
          %v1142 = vld [vmem:[#allocation2 + $0x68] sm:$0xff]
          %v1143 = vld [vmem:[#allocation2 + $0x70] sm:$0xff]
          %v1144 = vld [vmem:[#allocation2 + $0x78] sm:$0xff]
          %v1145 = vld [vmem:[#allocation2 + $0x80] sm:$0xff]
          %v1146 = vld [vmem:[#allocation2 + $0x88] sm:$0xff]
          %v1147 = vld [vmem:[#allocation2 + $0x90] sm:$0xff]
          %v1148 = vld [vmem:[#allocation2 + $0x98] sm:$0xff]
          %v1149 = vld [vmem:[#allocation2 + $0xa0] sm:$0xff]
          %v1150 = vld [vmem:[#allocation2 + $0xa8] sm:$0xff]
          %v1151 = vld [vmem:[#allocation2 + $0xb0] sm:$0xff]
          %v1152 = vld [vmem:[#allocation2 + $0xb8] sm:$0xff]
          %v1153 = vld [vmem:[#allocation2 + $0xc0] sm:$0xff]
          %v1154 = vld [vmem:[#allocation2 + $0xc8] sm:$0xff]
          %v1155 = vld [vmem:[#allocation2 + $0xd0] sm:$0xff]
          %v1156 = vld [vmem:[#allocation2 + $0xd8] sm:$0xff]
          %v1157 = vld [vmem:[#allocation2 + $0xe0] sm:$0xff]
          %v1158 = vld [vmem:[#allocation2 + $0xe8] sm:$0xff]
          %v1159 = vld [vmem:[#allocation2 + $0xf0] sm:$0xff]
          %v1160 = vld [vmem:[#allocation2 + $0xf8] sm:$0xff]
          %v1161 = vld [vmem:[#allocation2 + $0x100] sm:$0xff]
          %v1162 = vld [vmem:[#allocation2 + $0x108] sm:$0xff]
          %v1163 = vld [vmem:[#allocation2 + $0x110] sm:$0xff]
          %v1164 = vld [vmem:[#allocation2 + $0x118] sm:$0xff]
          %v1165 = vld [vmem:[#allocation2 + $0x120] sm:$0xff]
          %v1166 = vld [vmem:[#allocation2 + $0x128] sm:$0xff]
          %v1167 = vld [vmem:[#allocation2 + $0x130] sm:$0xff]
          %v1168 = vld [vmem:[#allocation2 + $0x138] sm:$0xff]
          %v1169 = vld [vmem:[#allocation2 + $0x140] sm:$0xff]
          %v1170 = vld [vmem:[#allocation2 + $0x148] sm:$0xff]
          %v1171 = vld [vmem:[#allocation2 + $0x150] sm:$0xff]
          %v1172 = vld [vmem:[#allocation2 + $0x158] sm:$0xff]
          %v1173 = vld [vmem:[#allocation2 + $0x160] sm:$0xff]
          %v1174 = vld [vmem:[#allocation2 + $0x168] sm:$0xff]
          %v1175 = vld [vmem:[#allocation2 + $0x170] sm:$0xff]
          %v1176 = vld [vmem:[#allocation2 + $0x178] sm:$0xff]
          %v1177 = vld [vmem:[#allocation2 + $0x180] sm:$0xff]
          %v1178 = vld [vmem:[#allocation2 + $0x188] sm:$0xff]
          %v1179 = vld [vmem:[#allocation2 + $0x190] sm:$0xff]
          %v1180 = vld [vmem:[#allocation2 + $0x198] sm:$0xff]
          %v1181 = vld [vmem:[#allocation2 + $0x1a0] sm:$0xff]
          %v1182 = vld [vmem:[#allocation2 + $0x1a8] sm:$0xff]
          %v1183 = vld [vmem:[#allocation2 + $0x1b0] sm:$0xff]
          %v1184 = vld [vmem:[#allocation2 + $0x1b8] sm:$0xff]
          %v1185 = vld [vmem:[#allocation2 + $0x1c0] sm:$0xff]
          %v1186 = vld [vmem:[#allocation2 + $0x1c8] sm:$0xff]
          %v1187 = vld [vmem:[#allocation2 + $0x1d0] sm:$0xff]
          %v1188 = vld [vmem:[#allocation2 + $0x1d8] sm:$0xff]
          %v1189 = vld [vmem:[#allocation2 + $0x1e0] sm:$0xff]
          %v1190 = vld [vmem:[#allocation2 + $0x1e8] sm:$0xff]
          %v1191 = vld [vmem:[#allocation2 + $0x1f0] sm:$0xff]
          %v1192 = vld [vmem:[#allocation2 + $0x1f8] sm:$0xff]
          %v1193 = vld [vmem:[%s254] sm:$0x1]
          %v1195 = vlaneseq
          %v1196 = vshrl.u32 %v1195, 7
          %v1197 = vsub.s32 0, %v1196
          %v1198 = vrot.slane %v1193, %v1197
          %v1200 = vadd.f32 %v1129, %v1198
          %v1201 = vadd.f32 %v1130, %v1198
          %v1202 = vadd.f32 %v1131, %v1198
          %v1203 = vadd.f32 %v1132, %v1198
          %v1204 = vadd.f32 %v1133, %v1198
          %v1205 = vadd.f32 %v1134, %v1198
          %v1206 = vadd.f32 %v1135, %v1198
          %v1207 = vadd.f32 %v1136, %v1198
          %v1208 = vadd.f32 %v1137, %v1198
          %v1209 = vadd.f32 %v1138, %v1198
          %v1210 = vadd.f32 %v1139, %v1198
          %v1211 = vadd.f32 %v1140, %v1198
          %v1212 = vadd.f32 %v1141, %v1198
          %v1213 = vadd.f32 %v1142, %v1198
          %v1214 = vadd.f32 %v1143, %v1198
          %v1215 = vadd.f32 %v1144, %v1198
          %v1216 = vadd.f32 %v1145, %v1198
          %v1217 = vadd.f32 %v1146, %v1198
          %v1218 = vadd.f32 %v1147, %v1198
          %v1219 = vadd.f32 %v1148, %v1198
          %v1220 = vadd.f32 %v1149, %v1198
          %v1221 = vadd.f32 %v1150, %v1198
          %v1222 = vadd.f32 %v1151, %v1198
          %v1223 = vadd.f32 %v1152, %v1198
          %v1224 = vadd.f32 %v1153, %v1198
          %v1225 = vadd.f32 %v1154, %v1198
          %v1226 = vadd.f32 %v1155, %v1198
          %v1227 = vadd.f32 %v1156, %v1198
          %v1228 = vadd.f32 %v1157, %v1198
          %v1229 = vadd.f32 %v1158, %v1198
          %v1230 = vadd.f32 %v1159, %v1198
          %v1231 = vadd.f32 %v1160, %v1198
          %v1232 = vadd.f32 %v1161, %v1198
          %v1233 = vadd.f32 %v1162, %v1198
          %v1234 = vadd.f32 %v1163, %v1198
          %v1235 = vadd.f32 %v1164, %v1198
          %v1236 = vadd.f32 %v1165, %v1198
          %v1237 = vadd.f32 %v1166, %v1198
          %v1238 = vadd.f32 %v1167, %v1198
          %v1239 = vadd.f32 %v1168, %v1198
          %v1240 = vadd.f32 %v1169, %v1198
          %v1241 = vadd.f32 %v1170, %v1198
          %v1242 = vadd.f32 %v1171, %v1198
          %v1243 = vadd.f32 %v1172, %v1198
          %v1244 = vadd.f32 %v1173, %v1198
          %v1245 = vadd.f32 %v1174, %v1198
          %v1246 = vadd.f32 %v1175, %v1198
          %v1247 = vadd.f32 %v1176, %v1198
          %v1248 = vadd.f32 %v1177, %v1198
          %v1249 = vadd.f32 %v1178, %v1198
          %v1250 = vadd.f32 %v1179, %v1198
          %v1251 = vadd.f32 %v1180, %v1198
          %v1252 = vadd.f32 %v1181, %v1198
          %v1253 = vadd.f32 %v1182, %v1198
          %v1254 = vadd.f32 %v1183, %v1198
          %v1255 = vadd.f32 %v1184, %v1198
          %v1256 = vadd.f32 %v1185, %v1198
          %v1257 = vadd.f32 %v1186, %v1198
          %v1258 = vadd.f32 %v1187, %v1198
          %v1259 = vadd.f32 %v1188, %v1198
          %v1260 = vadd.f32 %v1189, %v1198
          %v1261 = vadd.f32 %v1190, %v1198
          %v1262 = vadd.f32 %v1191, %v1198
          %v1263 = vadd.f32 %v1192, %v1198
          %v1264 = vpack.c.bf16 %v1201, %v1200
          %v1265 = vpack.c.bf16 %v1203, %v1202
          %v1266 = vpack.c.bf16 %v1205, %v1204
          %v1267 = vpack.c.bf16 %v1207, %v1206
          %v1268 = vpack.c.bf16 %v1209, %v1208
          %v1269 = vpack.c.bf16 %v1211, %v1210
          %v1270 = vpack.c.bf16 %v1213, %v1212
          %v1271 = vpack.c.bf16 %v1215, %v1214
          %v1272 = vpack.c.bf16 %v1217, %v1216
          %v1273 = vpack.c.bf16 %v1219, %v1218
          %v1274 = vpack.c.bf16 %v1221, %v1220
          %v1275 = vpack.c.bf16 %v1223, %v1222
          %v1276 = vpack.c.bf16 %v1225, %v1224
          %v1277 = vpack.c.bf16 %v1227, %v1226
          %v1278 = vpack.c.bf16 %v1229, %v1228
          %v1279 = vpack.c.bf16 %v1231, %v1230
          %v1280 = vpack.c.bf16 %v1233, %v1232
          %v1281 = vpack.c.bf16 %v1235, %v1234
          %v1282 = vpack.c.bf16 %v1237, %v1236
          %v1283 = vpack.c.bf16 %v1239, %v1238
          %v1284 = vpack.c.bf16 %v1241, %v1240
          %v1285 = vpack.c.bf16 %v1243, %v1242
          %v1286 = vpack.c.bf16 %v1245, %v1244
          %v1287 = vpack.c.bf16 %v1247, %v1246
          %v1288 = vpack.c.bf16 %v1249, %v1248
          %v1289 = vpack.c.bf16 %v1251, %v1250
          %v1290 = vpack.c.bf16 %v1253, %v1252
          %v1291 = vpack.c.bf16 %v1255, %v1254
          %v1292 = vpack.c.bf16 %v1257, %v1256
          %v1293 = vpack.c.bf16 %v1259, %v1258
          %v1294 = vpack.c.bf16 %v1261, %v1260
          %v1295 = vpack.c.bf16 %v1263, %v1262
          %v1328 = vunpack.c.l.b16 %v1264
          %v1329 = vunpack.c.h.b16 %v1264
          %v1330 = vunpack.c.l.b16 %v1265
          %v1331 = vunpack.c.h.b16 %v1265
          %v1332 = vunpack.c.l.b16 %v1266
          %v1333 = vunpack.c.h.b16 %v1266
          %v1334 = vunpack.c.l.b16 %v1267
          %v1335 = vunpack.c.h.b16 %v1267
          %v1336 = vunpack.c.l.b16 %v1268
          %v1337 = vunpack.c.h.b16 %v1268
          %v1338 = vunpack.c.l.b16 %v1269
          %v1339 = vunpack.c.h.b16 %v1269
          %v1340 = vunpack.c.l.b16 %v1270
          %v1341 = vunpack.c.h.b16 %v1270
          %v1342 = vunpack.c.l.b16 %v1271
          %v1343 = vunpack.c.h.b16 %v1271
          %v1344 = vunpack.c.l.b16 %v1272
          %v1345 = vunpack.c.h.b16 %v1272
          %v1346 = vunpack.c.l.b16 %v1273
          %v1347 = vunpack.c.h.b16 %v1273
          %v1348 = vunpack.c.l.b16 %v1274
          %v1349 = vunpack.c.h.b16 %v1274
          %v1350 = vunpack.c.l.b16 %v1275
          %v1351 = vunpack.c.h.b16 %v1275
          %v1352 = vunpack.c.l.b16 %v1276
          %v1353 = vunpack.c.h.b16 %v1276
          %v1354 = vunpack.c.l.b16 %v1277
          %v1355 = vunpack.c.h.b16 %v1277
          %v1356 = vunpack.c.l.b16 %v1278
          %v1357 = vunpack.c.h.b16 %v1278
          %v1358 = vunpack.c.l.b16 %v1279
          %v1359 = vunpack.c.h.b16 %v1279
          %v1360 = vunpack.c.l.b16 %v1280
          %v1361 = vunpack.c.h.b16 %v1280
          %v1362 = vunpack.c.l.b16 %v1281
          %v1363 = vunpack.c.h.b16 %v1281
          %v1364 = vunpack.c.l.b16 %v1282
          %v1365 = vunpack.c.h.b16 %v1282
          %v1366 = vunpack.c.l.b16 %v1283
          %v1367 = vunpack.c.h.b16 %v1283
          %v1368 = vunpack.c.l.b16 %v1284
          %v1369 = vunpack.c.h.b16 %v1284
          %v1370 = vunpack.c.l.b16 %v1285
          %v1371 = vunpack.c.h.b16 %v1285
          %v1372 = vunpack.c.l.b16 %v1286
          %v1373 = vunpack.c.h.b16 %v1286
          %v1374 = vunpack.c.l.b16 %v1287
          %v1375 = vunpack.c.h.b16 %v1287
          %v1376 = vunpack.c.l.b16 %v1288
          %v1377 = vunpack.c.h.b16 %v1288
          %v1378 = vunpack.c.l.b16 %v1289
          %v1379 = vunpack.c.h.b16 %v1289
          %v1380 = vunpack.c.l.b16 %v1290
          %v1381 = vunpack.c.h.b16 %v1290
          %v1382 = vunpack.c.l.b16 %v1291
          %v1383 = vunpack.c.h.b16 %v1291
          %v1384 = vunpack.c.l.b16 %v1292
          %v1385 = vunpack.c.h.b16 %v1292
          %v1386 = vunpack.c.l.b16 %v1293
          %v1387 = vunpack.c.h.b16 %v1293
          %v1388 = vunpack.c.l.b16 %v1294
          %v1389 = vunpack.c.h.b16 %v1294
          %v1390 = vunpack.c.l.b16 %v1295
          %v1391 = vunpack.c.h.b16 %v1295
          %v1392 = vpack.c.b16 %v1328, %v1328
          %v1393 = vpack.c.b16 %v1329, %v1329
          %v1394 = vpack.c.b16 %v1330, %v1330
          %v1395 = vpack.c.b16 %v1331, %v1331
          %v1396 = vpack.c.b16 %v1332, %v1332
          %v1397 = vpack.c.b16 %v1333, %v1333
          %v1398 = vpack.c.b16 %v1334, %v1334
          %v1399 = vpack.c.b16 %v1335, %v1335
          %v1400 = vpack.c.b16 %v1336, %v1336
          %v1401 = vpack.c.b16 %v1337, %v1337
          %v1402 = vpack.c.b16 %v1338, %v1338
          %v1403 = vpack.c.b16 %v1339, %v1339
          %v1404 = vpack.c.b16 %v1340, %v1340
          %v1405 = vpack.c.b16 %v1341, %v1341
          %v1406 = vpack.c.b16 %v1342, %v1342
          %v1407 = vpack.c.b16 %v1343, %v1343
          %v1408 = vpack.c.b16 %v1344, %v1344
          %v1409 = vpack.c.b16 %v1345, %v1345
          %v1410 = vpack.c.b16 %v1346, %v1346
          %v1411 = vpack.c.b16 %v1347, %v1347
          %v1412 = vpack.c.b16 %v1348, %v1348
          %v1413 = vpack.c.b16 %v1349, %v1349
          %v1414 = vpack.c.b16 %v1350, %v1350
          %v1415 = vpack.c.b16 %v1351, %v1351
          %v1416 = vpack.c.b16 %v1352, %v1352
          %v1417 = vpack.c.b16 %v1353, %v1353
          %v1418 = vpack.c.b16 %v1354, %v1354
          %v1419 = vpack.c.b16 %v1355, %v1355
          %v1420 = vpack.c.b16 %v1356, %v1356
          %v1421 = vpack.c.b16 %v1357, %v1357
          %v1422 = vpack.c.b16 %v1358, %v1358
          %v1423 = vpack.c.b16 %v1359, %v1359
          %v1424 = vpack.c.b16 %v1360, %v1360
          %v1425 = vpack.c.b16 %v1361, %v1361
          %v1426 = vpack.c.b16 %v1362, %v1362
          %v1427 = vpack.c.b16 %v1363, %v1363
          %v1428 = vpack.c.b16 %v1364, %v1364
          %v1429 = vpack.c.b16 %v1365, %v1365
          %v1430 = vpack.c.b16 %v1366, %v1366
          %v1431 = vpack.c.b16 %v1367, %v1367
          %v1432 = vpack.c.b16 %v1368, %v1368
          %v1433 = vpack.c.b16 %v1369, %v1369
          %v1434 = vpack.c.b16 %v1370, %v1370
          %v1435 = vpack.c.b16 %v1371, %v1371
          %v1436 = vpack.c.b16 %v1372, %v1372
          %v1437 = vpack.c.b16 %v1373, %v1373
          %v1438 = vpack.c.b16 %v1374, %v1374
          %v1439 = vpack.c.b16 %v1375, %v1375
          %v1440 = vpack.c.b16 %v1376, %v1376
          %v1441 = vpack.c.b16 %v1377, %v1377
          %v1442 = vpack.c.b16 %v1378, %v1378
          %v1443 = vpack.c.b16 %v1379, %v1379
          %v1444 = vpack.c.b16 %v1380, %v1380
          %v1445 = vpack.c.b16 %v1381, %v1381
          %v1446 = vpack.c.b16 %v1382, %v1382
          %v1447 = vpack.c.b16 %v1383, %v1383
          %v1448 = vpack.c.b16 %v1384, %v1384
          %v1449 = vpack.c.b16 %v1385, %v1385
          %v1450 = vpack.c.b16 %v1386, %v1386
          %v1451 = vpack.c.b16 %v1387, %v1387
          %v1452 = vpack.c.b16 %v1388, %v1388
          %v1453 = vpack.c.b16 %v1389, %v1389
          %v1454 = vpack.c.b16 %v1390, %v1390
          %v1455 = vpack.c.b16 %v1391, %v1391
          %1520 = vst [vmem:[%s249] sm:$0xf] %v1392
          %1521 = vst [vmem:[%s249 + $0x4] sm:$0xf] %v1393
          %1522 = vst [vmem:[%s249 + $0x8] sm:$0xf] %v1394
          %1523 = vst [vmem:[%s249 + $0xc] sm:$0xf] %v1395
          %1524 = vst [vmem:[%s249 + $0x10] sm:$0xf] %v1396
          %1525 = vst [vmem:[%s249 + $0x14] sm:$0xf] %v1397
          %1526 = vst [vmem:[%s249 + $0x18] sm:$0xf] %v1398
          %1527 = vst [vmem:[%s249 + $0x1c] sm:$0xf] %v1399
          %1528 = vst [vmem:[%s249 + $0x20] sm:$0xf] %v1400
          %1529 = vst [vmem:[%s249 + $0x24] sm:$0xf] %v1401
          %1530 = vst [vmem:[%s249 + $0x28] sm:$0xf] %v1402
          %1531 = vst [vmem:[%s249 + $0x2c] sm:$0xf] %v1403
          %1532 = vst [vmem:[%s249 + $0x30] sm:$0xf] %v1404
          %1533 = vst [vmem:[%s249 + $0x34] sm:$0xf] %v1405
          %1534 = vst [vmem:[%s249 + $0x38] sm:$0xf] %v1406
          %1535 = vst [vmem:[%s249 + $0x3c] sm:$0xf] %v1407
          %1536 = vst [vmem:[%s249 + $0x40] sm:$0xf] %v1408
          %1537 = vst [vmem:[%s249 + $0x44] sm:$0xf] %v1409
          %1538 = vst [vmem:[%s249 + $0x48] sm:$0xf] %v1410
          %1539 = vst [vmem:[%s249 + $0x4c] sm:$0xf] %v1411
          %1540 = vst [vmem:[%s249 + $0x50] sm:$0xf] %v1412
          %1541 = vst [vmem:[%s249 + $0x54] sm:$0xf] %v1413
          %1542 = vst [vmem:[%s249 + $0x58] sm:$0xf] %v1414
          %1543 = vst [vmem:[%s249 + $0x5c] sm:$0xf] %v1415
          %1544 = vst [vmem:[%s249 + $0x60] sm:$0xf] %v1416
          %1545 = vst [vmem:[%s249 + $0x64] sm:$0xf] %v1417
          %1546 = vst [vmem:[%s249 + $0x68] sm:$0xf] %v1418
          %1547 = vst [vmem:[%s249 + $0x6c] sm:$0xf] %v1419
          %1548 = vst [vmem:[%s249 + $0x70] sm:$0xf] %v1420
          %1549 = vst [vmem:[%s249 + $0x74] sm:$0xf] %v1421
          %1550 = vst [vmem:[%s249 + $0x78] sm:$0xf] %v1422
          %1551 = vst [vmem:[%s249 + $0x7c] sm:$0xf] %v1423
          %1552 = vst [vmem:[%s249 + $0x80] sm:$0xf] %v1424
          %1553 = vst [vmem:[%s249 + $0x84] sm:$0xf] %v1425
          %1554 = vst [vmem:[%s249 + $0x88] sm:$0xf] %v1426
          %1555 = vst [vmem:[%s249 + $0x8c] sm:$0xf] %v1427
          %1556 = vst [vmem:[%s249 + $0x90] sm:$0xf] %v1428
          %1557 = vst [vmem:[%s249 + $0x94] sm:$0xf] %v1429
          %1558 = vst [vmem:[%s249 + $0x98] sm:$0xf] %v1430
          %1559 = vst [vmem:[%s249 + $0x9c] sm:$0xf] %v1431
          %1560 = vst [vmem:[%s249 + $0xa0] sm:$0xf] %v1432
          %1561 = vst [vmem:[%s249 + $0xa4] sm:$0xf] %v1433
          %1562 = vst [vmem:[%s249 + $0xa8] sm:$0xf] %v1434
          %1563 = vst [vmem:[%s249 + $0xac] sm:$0xf] %v1435
          %1564 = vst [vmem:[%s249 + $0xb0] sm:$0xf] %v1436
          %1565 = vst [vmem:[%s249 + $0xb4] sm:$0xf] %v1437
          %1566 = vst [vmem:[%s249 + $0xb8] sm:$0xf] %v1438
          %1567 = vst [vmem:[%s249 + $0xbc] sm:$0xf] %v1439
          %1568 = vst [vmem:[%s249 + $0xc0] sm:$0xf] %v1440
          %1569 = vst [vmem:[%s249 + $0xc4] sm:$0xf] %v1441
          %1570 = vst [vmem:[%s249 + $0xc8] sm:$0xf] %v1442
          %1571 = vst [vmem:[%s249 + $0xcc] sm:$0xf] %v1443
          %1572 = vst [vmem:[%s249 + $0xd0] sm:$0xf] %v1444
          %1573 = vst [vmem:[%s249 + $0xd4] sm:$0xf] %v1445
          %1574 = vst [vmem:[%s249 + $0xd8] sm:$0xf] %v1446
          %1575 = vst [vmem:[%s249 + $0xdc] sm:$0xf] %v1447
          %1576 = vst [vmem:[%s249 + $0xe0] sm:$0xf] %v1448
          %1577 = vst [vmem:[%s249 + $0xe4] sm:$0xf] %v1449
          %1578 = vst [vmem:[%s249 + $0xe8] sm:$0xf] %v1450
          %1579 = vst [vmem:[%s249 + $0xec] sm:$0xf] %v1451
          %1580 = vst [vmem:[%s249 + $0xf0] sm:$0xf] %v1452
          %1581 = vst [vmem:[%s249 + $0xf4] sm:$0xf] %v1453
          %1582 = vst [vmem:[%s249 + $0xf8] sm:$0xf] %v1454
          %1583 = vst [vmem:[%s249 + $0xfc] sm:$0xf] %v1455
        $region48: #{tpu_custom_call.1} parent=31 // pred_fallthru
          _
        %s1584 = sand.u32 %s132, 1
        %s1585 = scalar_lea.sflag [#allocation5], %s1584
        %s1586 = sand.u32 %s132, 1
        %s1587 = smul.addr %s1586, 256
        %s1588 = scalar_lea.vmem [#allocation8], %s1587
        // Predicated region
        $region49: #{tpu_custom_call.1} parent=31 // pred_check
          %p1589 = pneg %p142
        $region50: #{tpu_custom_call.1} parent=31 // pred_check_branch
          %1591 = sbr.rel (%p1589) target = $region52
        $region51: #{tpu_custom_call.1} parent=31 // pred_region
          %s1592 = smul.u32 64, %s26
          %s1594 = ssub.s32 4096, 4096
          %1595 = vsyncadd %s1585, %s1594
          %s1596 = sadd.s32 %s27, %s1592
          %s1597 = smul.addr %s1596, 64
          %s1598 = scalar_lea.hbm %s3, %s1597
          %s1599 = sshll.u32 %s1588, 4
          %s1600 = int_to_ptr.vmem [resolvable:$true] %s1599
          %1605 = dma.vmem_to_hbm [thread:$0]  %s1600, 4096, %s1598, %s1585, 64, 64, 4
        $region52: #{tpu_custom_call.1} parent=31 // pred_fallthru
          _
      $region32: #{tpu_custom_call.1} parent=5 // pred_fallthru
        _
      %p1606 = scmp.le.s32.totalorder 2, %s16
      // Predicated region
      $region53: #{tpu_custom_call.1} parent=5 // pred_check
        %p1607 = pneg %p1606
      $region54: #{tpu_custom_call.1} parent=5 // pred_check_branch
        %1609 = sbr.rel (%p1607) target = $region56
      $region55: #{tpu_custom_call.1} parent=5 // pred_region
        %s1610 = ssub.s32 %s16, 2
        // Predicated region
        $region57: #{tpu_custom_call.1} parent=55 // pred_check
          %p1611 = pneg %p148
        $region58: #{tpu_custom_call.1} parent=55 // pred_check_branch
          %1613 = sbr.rel (%p1611) target = $region60
        $region59: #{tpu_custom_call.1} parent=55 // pred_region
          %s1614 = sand.u32 %s133, 1
          %s1615 = scalar_lea.sflag [#allocation5], %s1614
          %s1616 = sand.u32 %s133, 1
          %s1617 = smul.addr %s1616, 256
          %s1618 = scalar_lea.vmem [#allocation8], %s1617
          %1619 = dma.done %s1615, 4096
        $region60: #{tpu_custom_call.1} parent=55 // pred_fallthru
          _
      $region56: #{tpu_custom_call.1} parent=5 // pred_fallthru
        _
    $region6: #{tpu_custom_call.1} parent=1 // loop_footer
      %s20 = sadd.s32 1, %s16
    $region7: #{tpu_custom_call.1} parent=1 // loop_footer_branch
      %15 = sbr.rel target = $region3
    $region8: #{tpu_custom_call.1} parent=1 // loop_exit
      _
    %1620 = vsyncpa [#allocation4], 1
    %s1621 = scalar_lea.sflag [#allocation4], 1
    %1622 = vsyncpa %s1621, 1
    %1623 = vsyncpa [#allocation7], 1
    %1624 = vsyncpa [#allocation5], 1
    %s1625 = scalar_lea.sflag [#allocation5], 1
    %1626 = vsyncpa %s1625, 1

</llo_original>
